<compile_context>
chip_gen: v5e
topology: v5e:2x2
jax: 0.10.0
libtpu: 0.0.40
codegen_flags: <defaults>
</compile_context>

<pallas_src>
import functools

import jax
import jax.numpy as jnp
import numpy as np
from jax import lax
from jax.experimental import pallas as pl
from jax.experimental.pallas import tpu as pltpu


def _conv_meanpool_kernel(x_ref, w_ref, pw_ref, b_ref, o_ref,
                          *, k, wpad, hp, h, ho, wo_pad):
    # x_ref:  (1, Cp, (Hp+1)*Wpad) bf16  zero-padded image, row stride Wpad (%128==0)
    # w_ref:  (k*k, Cout, Cp)      bf16  per-tap weight matrices, tap index dy*k+dx
    # pw_ref: (Wpad, Wo_pad)       f32   width-pool matrix (0.25 at (2oj,oj),(2oj+1,oj))
    # b_ref:  (Cout, 1)            f32   conv bias (added after pooling)
    # o_ref:  (1, Cout, Ho*Wo_pad)       lane-dense output
    lv = h * wpad                      # flattened H x Wpad conv-output band
    x = x_ref[0]                       # (Cp, (Hp+1)*Wpad) bf16

    # dx-shifted copies of the image: one small realignment per dx (dx <= k-1 lanes),
    # shared by every dy tap.  dx = 0 is an aligned prefix (no data movement).
    span = hp * wpad
    xs = [x[:, dx:dx + span] for dx in range(k)]

    # ---- k*k-tap conv: per-tap bf16 MXU matmuls, f32 accumulation (no im2col scratch)
    acc = None
    for dy in range(k):
        base = dy * wpad               # multiple of 128 -> free aligned lane window
        for dx in range(k):
            tap = xs[dx][:, base:base + lv]                      # (Cp, H*Wpad) bf16
            part = jnp.dot(w_ref[dy * k + dx], tap,
                           preferred_element_type=jnp.float32)   # (Cout, H*Wpad) f32
            acc = part if acc is None else acc + part

    # ---- 2x2 mean pool (separable) + bias, lane-dense stores -----------------------
    pw = pw_ref[...]                   # (Wpad, Wo_pad) f32
    bias = b_ref[...]                  # (Cout, 1) f32
    for oi in range(ho):
        top = acc[:, (2 * oi) * wpad:(2 * oi + 1) * wpad]        # aligned row slices
        bot = acc[:, (2 * oi + 1) * wpad:(2 * oi + 2) * wpad]
        row = jnp.dot(top + bot, pw,
                      preferred_element_type=jnp.float32) + bias  # (Cout, Wo_pad)
        o_ref[0, :, oi * wo_pad:(oi + 1) * wo_pad] = row.astype(o_ref.dtype)


def conv_mean_pool(x_nchw, w, b, *, kernel_size=3):
    """ConvMeanPool forward.

    x_nchw: (N, C, H, W); w: (Cout, Cin, k, k) PyTorch layout; b: (Cout,).
    Returns (N, Cout, H//2, W//2) = mean_pool_2x2(conv_same(x, w, b)).
    """
    N, C, H, W = x_nchw.shape
    Cout = w.shape[0]
    k = kernel_size
    assert k % 2 == 1, "'same' padding in the reference module requires odd kernel_size"
    p = (k - 1) // 2
    assert H % 2 == 0 and W % 2 == 0, "2x2 mean pool needs even spatial dims"

    Hp, Wp = H + 2 * p, W + 2 * p
    Wpad = max(128, ((Wp + 127) // 128) * 128)     # lane-align each padded row
    Cp = ((C + 7) // 8) * 8                        # sublane-align channels
    Ho, Wo = H // 2, W // 2
    Wo_pad = max(128, ((Wo + 127) // 128) * 128)   # lane-align the output rows
    L = (Hp + 1) * Wpad                            # +1 zero row: dx-shifted windows never
                                                   # run off the end of the buffer

    # --- one-time HBM-side prep: zero pads, free reshapes, single bf16 casts ----------
    xp = jnp.pad(x_nchw, ((0, 0), (0, Cp - C), (p, p + 1), (p, Wpad - W - p)))
    xf = xp.reshape(N, Cp, L).astype(jnp.bfloat16)                 # (N, Cp, (Hp+1)*Wpad)

    # PyTorch (Cout, Cin, kh, kw) -> per-tap (k*k, Cout, Cp), cast to bf16 once here.
    wt = jnp.transpose(w, (2, 3, 0, 1))                            # (k, k, Cout, Cin)
    wt = jnp.pad(wt, ((0, 0), (0, 0), (0, 0), (0, Cp - C)))
    w_taps = wt.reshape(k * k, Cout, Cp).astype(jnp.bfloat16)
    b_col = b.reshape(Cout, 1).astype(jnp.float32)

    # Tiny width-pool matrix: column oj takes 0.25*(col 2oj + col 2oj+1); the row pair
    # is summed in the kernel, so this completes the 2x2 mean.  Columns >= Wo stay 0.
    pw_np = np.zeros((Wpad, Wo_pad), np.float32)
    for oj in range(Wo):
        pw_np[2 * oj, oj] = 0.25
        pw_np[2 * oj + 1, oj] = 0.25
    pw = jnp.asarray(pw_np)

    kern = functools.partial(_conv_meanpool_kernel, k=k, wpad=Wpad, hp=Hp, h=H,
                             ho=Ho, wo_pad=Wo_pad)
    out = pl.pallas_call(
        kern,
        out_shape=jax.ShapeDtypeStruct((N, Cout, Ho * Wo_pad), x_nchw.dtype),
        grid_spec=pltpu.PrefetchScalarGridSpec(
            num_scalar_prefetch=0,
            grid=(N,),
            in_specs=[
                pl.BlockSpec((1, Cp, L), lambda n: (n, 0, 0)),
                pl.BlockSpec((k * k, Cout, Cp), lambda n: (0, 0, 0)),
                pl.BlockSpec((Wpad, Wo_pad), lambda n: (0, 0)),
                pl.BlockSpec((Cout, 1), lambda n: (0, 0)),
            ],
            out_specs=pl.BlockSpec((1, Cout, Ho * Wo_pad), lambda n: (n, 0, 0)),
        ),
        compiler_params=pltpu.CompilerParams(
            dimension_semantics=("parallel",),
            vmem_limit_bytes=32 * 1024 * 1024),
    )(xf, w_taps, pw, b_col)

    return out.reshape(N, Cout, Ho, Wo_pad)[..., :Wo]


# ----------------------------- pure-JAX reference -------------------------------------
def _ref_forward(x, w, b, k):
    p = (k - 1) // 2
    y = lax.conv_general_dilated(
        x, w, window_strides=(1, 1), padding=((p, p), (p, p)),
        dimension_numbers=("NCHW", "OIHW", "NCHW")) + b[None, :, None, None]
    return (y[:, :, ::2, ::2] + y[:, :, 1::2, ::2]
            + y[:, :, ::2, 1::2] + y[:, :, 1::2, 1::2]) / 4.0


if __name__ == "__main__":
    N, Cin, Cout, H, W, K = 2, 4, 8, 16, 16, 3
    key = jax.random.PRNGKey(0)
    kx, kw, kb = jax.random.split(key, 3)

    x = jax.random.normal(kx, (N, Cin, H, W), jnp.float32)
    w = jax.random.normal(kw, (Cout, Cin, K, K), jnp.float32) * 0.05
    b = jax.random.normal(kb, (Cout,), jnp.float32) * 0.01

    out = jax.block_until_ready(conv_mean_pool(x, w, b, kernel_size=K))

    ref = _ref_forward(x, w, b, K)
    assert out.shape == (N, Cout, H // 2, W // 2)
    err = jnp.max(jnp.abs(out - ref))
    # bf16 MXU inputs with f32 accumulation -> tolerance loosened vs. the f32 version.
    assert jnp.allclose(out, ref, atol=2e-2, rtol=2e-2), f"max err {err}"
    print("KERNEL_OK")
</pallas_src>

<mosaic_0001>
module attributes {stable_mosaic.version = 11 : i64} {
  func.func @_conv_meanpool_kernel(%arg0: i32, %arg1: memref<1x8x2432xbf16, #tpu.memory_space<vmem>>, %arg2: memref<9x8x8xbf16, #tpu.memory_space<vmem>>, %arg3: memref<128x128xf32, #tpu.memory_space<vmem>>, %arg4: memref<8x1xf32, #tpu.memory_space<vmem>>, %arg5: memref<1x8x1024xf32, #tpu.memory_space<vmem>>) attributes {dimension_semantics = [#tpu.dimension_semantics<parallel>], iteration_bounds = array<i64: 2>, scalar_prefetch = 0 : i64, scratch_operands = 0 : i64, tpu.core_type = #tpu.core_type<tc>, window_params = [{transform_indices = @transform_0, window_bounds = array<i64: 1, 8, 2432>}, {pipeline_mode = #tpu.pipeline_mode<synchronous>, transform_indices = @transform_1, window_bounds = array<i64: 9, 8, 8>}, {pipeline_mode = #tpu.pipeline_mode<synchronous>, transform_indices = @transform_2, window_bounds = array<i64: 128, 128>}, {pipeline_mode = #tpu.pipeline_mode<synchronous>, transform_indices = @transform_3, window_bounds = array<i64: 8, 1>}, {transform_indices = @transform_4, window_bounds = array<i64: 1, 8, 1024>}]} {
    %c0 = arith.constant 0 : index
    %c0_0 = arith.constant 0 : index
    %c0_1 = arith.constant 0 : index
    %0 = vector.load %arg1[%c0, %c0_0, %c0_1] : memref<1x8x2432xbf16, #tpu.memory_space<vmem>>, vector<1x8x2432xbf16>
    %1 = vector.shape_cast %0 : vector<1x8x2432xbf16> to vector<8x2432xbf16>
    %2 = vector.extract_strided_slice %1 {offsets = [0, 0], sizes = [8, 2304], strides = [1, 1]} : vector<8x2432xbf16> to vector<8x2304xbf16>
    %3 = vector.extract_strided_slice %1 {offsets = [0, 1], sizes = [8, 2304], strides = [1, 1]} : vector<8x2432xbf16> to vector<8x2304xbf16>
    %4 = vector.extract_strided_slice %1 {offsets = [0, 2], sizes = [8, 2304], strides = [1, 1]} : vector<8x2432xbf16> to vector<8x2304xbf16>
    %5 = vector.extract_strided_slice %2 {offsets = [0, 0], sizes = [8, 2048], strides = [1, 1]} : vector<8x2304xbf16> to vector<8x2048xbf16>
    %c0_2 = arith.constant 0 : index
    %c0_3 = arith.constant 0 : index
    %c0_4 = arith.constant 0 : index
    %6 = vector.load %arg2[%c0_2, %c0_3, %c0_4] : memref<9x8x8xbf16, #tpu.memory_space<vmem>>, vector<1x8x8xbf16>
    %7 = vector.shape_cast %6 : vector<1x8x8xbf16> to vector<8x8xbf16>
    %cst = arith.constant dense<0.000000e+00> : vector<8x2048xf32>
    %8 = tpu.matmul %7, %5, %cst {dimension_numbers = #tpu.dot_dimension_numbers<[1], [0], [0], [1], [0, 0, 1, 1], [], []>} : vector<8x8xbf16>, vector<8x2048xbf16>, vector<8x2048xf32> -> vector<8x2048xf32>
    %9 = vector.extract_strided_slice %3 {offsets = [0, 0], sizes = [8, 2048], strides = [1, 1]} : vector<8x2304xbf16> to vector<8x2048xbf16>
    %c1 = arith.constant 1 : index
    %c0_5 = arith.constant 0 : index
    %c0_6 = arith.constant 0 : index
    %10 = vector.load %arg2[%c1, %c0_5, %c0_6] : memref<9x8x8xbf16, #tpu.memory_space<vmem>>, vector<1x8x8xbf16>
    %11 = vector.shape_cast %10 : vector<1x8x8xbf16> to vector<8x8xbf16>
    %cst_7 = arith.constant dense<0.000000e+00> : vector<8x2048xf32>
    %12 = tpu.matmul %11, %9, %cst_7 {dimension_numbers = #tpu.dot_dimension_numbers<[1], [0], [0], [1], [0, 0, 1, 1], [], []>} : vector<8x8xbf16>, vector<8x2048xbf16>, vector<8x2048xf32> -> vector<8x2048xf32>
    %13 = arith.addf %8, %12 : vector<8x2048xf32>
    %14 = vector.extract_strided_slice %4 {offsets = [0, 0], sizes = [8, 2048], strides = [1, 1]} : vector<8x2304xbf16> to vector<8x2048xbf16>
    %c2 = arith.constant 2 : index
    %c0_8 = arith.constant 0 : index
    %c0_9 = arith.constant 0 : index
    %15 = vector.load %arg2[%c2, %c0_8, %c0_9] : memref<9x8x8xbf16, #tpu.memory_space<vmem>>, vector<1x8x8xbf16>
    %16 = vector.shape_cast %15 : vector<1x8x8xbf16> to vector<8x8xbf16>
    %cst_10 = arith.constant dense<0.000000e+00> : vector<8x2048xf32>
    %17 = tpu.matmul %16, %14, %cst_10 {dimension_numbers = #tpu.dot_dimension_numbers<[1], [0], [0], [1], [0, 0, 1, 1], [], []>} : vector<8x8xbf16>, vector<8x2048xbf16>, vector<8x2048xf32> -> vector<8x2048xf32>
    %18 = arith.addf %13, %17 : vector<8x2048xf32>
    %19 = vector.extract_strided_slice %2 {offsets = [0, 128], sizes = [8, 2048], strides = [1, 1]} : vector<8x2304xbf16> to vector<8x2048xbf16>
    %c3 = arith.constant 3 : index
    %c0_11 = arith.constant 0 : index
    %c0_12 = arith.constant 0 : index
    %20 = vector.load %arg2[%c3, %c0_11, %c0_12] : memref<9x8x8xbf16, #tpu.memory_space<vmem>>, vector<1x8x8xbf16>
    %21 = vector.shape_cast %20 : vector<1x8x8xbf16> to vector<8x8xbf16>
    %cst_13 = arith.constant dense<0.000000e+00> : vector<8x2048xf32>
    %22 = tpu.matmul %21, %19, %cst_13 {dimension_numbers = #tpu.dot_dimension_numbers<[1], [0], [0], [1], [0, 0, 1, 1], [], []>} : vector<8x8xbf16>, vector<8x2048xbf16>, vector<8x2048xf32> -> vector<8x2048xf32>
    %23 = arith.addf %18, %22 : vector<8x2048xf32>
    %24 = vector.extract_strided_slice %3 {offsets = [0, 128], sizes = [8, 2048], strides = [1, 1]} : vector<8x2304xbf16> to vector<8x2048xbf16>
    %c4 = arith.constant 4 : index
    %c0_14 = arith.constant 0 : index
    %c0_15 = arith.constant 0 : index
    %25 = vector.load %arg2[%c4, %c0_14, %c0_15] : memref<9x8x8xbf16, #tpu.memory_space<vmem>>, vector<1x8x8xbf16>
    %26 = vector.shape_cast %25 : vector<1x8x8xbf16> to vector<8x8xbf16>
    %cst_16 = arith.constant dense<0.000000e+00> : vector<8x2048xf32>
    %27 = tpu.matmul %26, %24, %cst_16 {dimension_numbers = #tpu.dot_dimension_numbers<[1], [0], [0], [1], [0, 0, 1, 1], [], []>} : vector<8x8xbf16>, vector<8x2048xbf16>, vector<8x2048xf32> -> vector<8x2048xf32>
    %28 = arith.addf %23, %27 : vector<8x2048xf32>
    %29 = vector.extract_strided_slice %4 {offsets = [0, 128], sizes = [8, 2048], strides = [1, 1]} : vector<8x2304xbf16> to vector<8x2048xbf16>
    %c5 = arith.constant 5 : index
    %c0_17 = arith.constant 0 : index
    %c0_18 = arith.constant 0 : index
    %30 = vector.load %arg2[%c5, %c0_17, %c0_18] : memref<9x8x8xbf16, #tpu.memory_space<vmem>>, vector<1x8x8xbf16>
    %31 = vector.shape_cast %30 : vector<1x8x8xbf16> to vector<8x8xbf16>
    %cst_19 = arith.constant dense<0.000000e+00> : vector<8x2048xf32>
    %32 = tpu.matmul %31, %29, %cst_19 {dimension_numbers = #tpu.dot_dimension_numbers<[1], [0], [0], [1], [0, 0, 1, 1], [], []>} : vector<8x8xbf16>, vector<8x2048xbf16>, vector<8x2048xf32> -> vector<8x2048xf32>
    %33 = arith.addf %28, %32 : vector<8x2048xf32>
    %34 = vector.extract_strided_slice %2 {offsets = [0, 256], sizes = [8, 2048], strides = [1, 1]} : vector<8x2304xbf16> to vector<8x2048xbf16>
    %c6 = arith.constant 6 : index
    %c0_20 = arith.constant 0 : index
    %c0_21 = arith.constant 0 : index
    %35 = vector.load %arg2[%c6, %c0_20, %c0_21] : memref<9x8x8xbf16, #tpu.memory_space<vmem>>, vector<1x8x8xbf16>
    %36 = vector.shape_cast %35 : vector<1x8x8xbf16> to vector<8x8xbf16>
    %cst_22 = arith.constant dense<0.000000e+00> : vector<8x2048xf32>
    %37 = tpu.matmul %36, %34, %cst_22 {dimension_numbers = #tpu.dot_dimension_numbers<[1], [0], [0], [1], [0, 0, 1, 1], [], []>} : vector<8x8xbf16>, vector<8x2048xbf16>, vector<8x2048xf32> -> vector<8x2048xf32>
    %38 = arith.addf %33, %37 : vector<8x2048xf32>
    %39 = vector.extract_strided_slice %3 {offsets = [0, 256], sizes = [8, 2048], strides = [1, 1]} : vector<8x2304xbf16> to vector<8x2048xbf16>
    %c7 = arith.constant 7 : index
    %c0_23 = arith.constant 0 : index
    %c0_24 = arith.constant 0 : index
    %40 = vector.load %arg2[%c7, %c0_23, %c0_24] : memref<9x8x8xbf16, #tpu.memory_space<vmem>>, vector<1x8x8xbf16>
    %41 = vector.shape_cast %40 : vector<1x8x8xbf16> to vector<8x8xbf16>
    %cst_25 = arith.constant dense<0.000000e+00> : vector<8x2048xf32>
    %42 = tpu.matmul %41, %39, %cst_25 {dimension_numbers = #tpu.dot_dimension_numbers<[1], [0], [0], [1], [0, 0, 1, 1], [], []>} : vector<8x8xbf16>, vector<8x2048xbf16>, vector<8x2048xf32> -> vector<8x2048xf32>
    %43 = arith.addf %38, %42 : vector<8x2048xf32>
    %44 = vector.extract_strided_slice %4 {offsets = [0, 256], sizes = [8, 2048], strides = [1, 1]} : vector<8x2304xbf16> to vector<8x2048xbf16>
    %c8 = arith.constant 8 : index
    %c0_26 = arith.constant 0 : index
    %c0_27 = arith.constant 0 : index
    %45 = vector.load %arg2[%c8, %c0_26, %c0_27] : memref<9x8x8xbf16, #tpu.memory_space<vmem>>, vector<1x8x8xbf16>
    %46 = vector.shape_cast %45 : vector<1x8x8xbf16> to vector<8x8xbf16>
    %cst_28 = arith.constant dense<0.000000e+00> : vector<8x2048xf32>
    %47 = tpu.matmul %46, %44, %cst_28 {dimension_numbers = #tpu.dot_dimension_numbers<[1], [0], [0], [1], [0, 0, 1, 1], [], []>} : vector<8x8xbf16>, vector<8x2048xbf16>, vector<8x2048xf32> -> vector<8x2048xf32>
    %48 = arith.addf %43, %47 : vector<8x2048xf32>
    %c0_29 = arith.constant 0 : index
    %c0_30 = arith.constant 0 : index
    %49 = vector.load %arg3[%c0_29, %c0_30] : memref<128x128xf32, #tpu.memory_space<vmem>>, vector<128x128xf32>
    %c0_31 = arith.constant 0 : index
    %c0_32 = arith.constant 0 : index
    %50 = vector.load %arg4[%c0_31, %c0_32] : memref<8x1xf32, #tpu.memory_space<vmem>>, vector<8x1xf32>
    %51 = vector.extract_strided_slice %48 {offsets = [0, 0], sizes = [8, 128], strides = [1, 1]} : vector<8x2048xf32> to vector<8x128xf32>
    %52 = vector.extract_strided_slice %48 {offsets = [0, 128], sizes = [8, 128], strides = [1, 1]} : vector<8x2048xf32> to vector<8x128xf32>
    %53 = arith.addf %51, %52 : vector<8x128xf32>
    %cst_33 = arith.constant dense<0.000000e+00> : vector<8x128xf32>
    %54 = tpu.matmul %53, %49, %cst_33 {dimension_numbers = #tpu.dot_dimension_numbers<[1], [0], [0], [1], [0, 0, 1, 1], [], []>} : vector<8x128xf32>, vector<128x128xf32>, vector<8x128xf32> -> vector<8x128xf32>
    %55 = vector.broadcast %50 : vector<8x1xf32> to vector<8x128xf32>
    %56 = arith.addf %54, %55 : vector<8x128xf32>
    %c0_34 = arith.constant 0 : index
    %c0_35 = arith.constant 0 : index
    %c0_36 = arith.constant 0 : index
    %57 = vector.load %arg5[%c0_34, %c0_35, %c0_36] : memref<1x8x1024xf32, #tpu.memory_space<vmem>>, vector<1x8x128xf32>
    %58 = vector.shape_cast %57 : vector<1x8x128xf32> to vector<8x128xf32>
    %59 = vector.shape_cast %56 : vector<8x128xf32> to vector<1x8x128xf32>
    tpu.vector_store %arg5[%c0_34, %c0_35, %c0_36], %59 {strides = array<i32>} : memref<1x8x1024xf32, #tpu.memory_space<vmem>>, vector<1x8x128xf32>,
    %60 = vector.extract_strided_slice %48 {offsets = [0, 256], sizes = [8, 128], strides = [1, 1]} : vector<8x2048xf32> to vector<8x128xf32>
    %61 = vector.extract_strided_slice %48 {offsets = [0, 384], sizes = [8, 128], strides = [1, 1]} : vector<8x2048xf32> to vector<8x128xf32>
    %62 = arith.addf %60, %61 : vector<8x128xf32>
    %cst_37 = arith.constant dense<0.000000e+00> : vector<8x128xf32>
    %63 = tpu.matmul %62, %49, %cst_37 {dimension_numbers = #tpu.dot_dimension_numbers<[1], [0], [0], [1], [0, 0, 1, 1], [], []>} : vector<8x128xf32>, vector<128x128xf32>, vector<8x128xf32> -> vector<8x128xf32>
    %64 = vector.broadcast %50 : vector<8x1xf32> to vector<8x128xf32>
    %65 = arith.addf %63, %64 : vector<8x128xf32>
    %c0_38 = arith.constant 0 : index
    %c0_39 = arith.constant 0 : index
    %c128 = arith.constant 128 : index
    %66 = vector.load %arg5[%c0_38, %c0_39, %c128] : memref<1x8x1024xf32, #tpu.memory_space<vmem>>, vector<1x8x128xf32>
    %67 = vector.shape_cast %66 : vector<1x8x128xf32> to vector<8x128xf32>
    %68 = vector.shape_cast %65 : vector<8x128xf32> to vector<1x8x128xf32>
    tpu.vector_store %arg5[%c0_38, %c0_39, %c128], %68 {strides = array<i32>} : memref<1x8x1024xf32, #tpu.memory_space<vmem>>, vector<1x8x128xf32>,
    %69 = vector.extract_strided_slice %48 {offsets = [0, 512], sizes = [8, 128], strides = [1, 1]} : vector<8x2048xf32> to vector<8x128xf32>
    %70 = vector.extract_strided_slice %48 {offsets = [0, 640], sizes = [8, 128], strides = [1, 1]} : vector<8x2048xf32> to vector<8x128xf32>
    %71 = arith.addf %69, %70 : vector<8x128xf32>
    %cst_40 = arith.constant dense<0.000000e+00> : vector<8x128xf32>
    %72 = tpu.matmul %71, %49, %cst_40 {dimension_numbers = #tpu.dot_dimension_numbers<[1], [0], [0], [1], [0, 0, 1, 1], [], []>} : vector<8x128xf32>, vector<128x128xf32>, vector<8x128xf32> -> vector<8x128xf32>
    %73 = vector.broadcast %50 : vector<8x1xf32> to vector<8x128xf32>
    %74 = arith.addf %72, %73 : vector<8x128xf32>
    %c0_41 = arith.constant 0 : index
    %c0_42 = arith.constant 0 : index
    %c256 = arith.constant 256 : index
    %75 = vector.load %arg5[%c0_41, %c0_42, %c256] : memref<1x8x1024xf32, #tpu.memory_space<vmem>>, vector<1x8x128xf32>
    %76 = vector.shape_cast %75 : vector<1x8x128xf32> to vector<8x128xf32>
    %77 = vector.shape_cast %74 : vector<8x128xf32> to vector<1x8x128xf32>
    tpu.vector_store %arg5[%c0_41, %c0_42, %c256], %77 {strides = array<i32>} : memref<1x8x1024xf32, #tpu.memory_space<vmem>>, vector<1x8x128xf32>,
    %78 = vector.extract_strided_slice %48 {offsets = [0, 768], sizes = [8, 128], strides = [1, 1]} : vector<8x2048xf32> to vector<8x128xf32>
    %79 = vector.extract_strided_slice %48 {offsets = [0, 896], sizes = [8, 128], strides = [1, 1]} : vector<8x2048xf32> to vector<8x128xf32>
    %80 = arith.addf %78, %79 : vector<8x128xf32>
    %cst_43 = arith.constant dense<0.000000e+00> : vector<8x128xf32>
    %81 = tpu.matmul %80, %49, %cst_43 {dimension_numbers = #tpu.dot_dimension_numbers<[1], [0], [0], [1], [0, 0, 1, 1], [], []>} : vector<8x128xf32>, vector<128x128xf32>, vector<8x128xf32> -> vector<8x128xf32>
    %82 = vector.broadcast %50 : vector<8x1xf32> to vector<8x128xf32>
    %83 = arith.addf %81, %82 : vector<8x128xf32>
    %c0_44 = arith.constant 0 : index
    %c0_45 = arith.constant 0 : index
    %c384 = arith.constant 384 : index
    %84 = vector.load %arg5[%c0_44, %c0_45, %c384] : memref<1x8x1024xf32, #tpu.memory_space<vmem>>, vector<1x8x128xf32>
    %85 = vector.shape_cast %84 : vector<1x8x128xf32> to vector<8x128xf32>
    %86 = vector.shape_cast %83 : vector<8x128xf32> to vector<1x8x128xf32>
    tpu.vector_store %arg5[%c0_44, %c0_45, %c384], %86 {strides = array<i32>} : memref<1x8x1024xf32, #tpu.memory_space<vmem>>, vector<1x8x128xf32>,
    %87 = vector.extract_strided_slice %48 {offsets = [0, 1024], sizes = [8, 128], strides = [1, 1]} : vector<8x2048xf32> to vector<8x128xf32>
    %88 = vector.extract_strided_slice %48 {offsets = [0, 1152], sizes = [8, 128], strides = [1, 1]} : vector<8x2048xf32> to vector<8x128xf32>
    %89 = arith.addf %87, %88 : vector<8x128xf32>
    %cst_46 = arith.constant dense<0.000000e+00> : vector<8x128xf32>
    %90 = tpu.matmul %89, %49, %cst_46 {dimension_numbers = #tpu.dot_dimension_numbers<[1], [0], [0], [1], [0, 0, 1, 1], [], []>} : vector<8x128xf32>, vector<128x128xf32>, vector<8x128xf32> -> vector<8x128xf32>
    %91 = vector.broadcast %50 : vector<8x1xf32> to vector<8x128xf32>
    %92 = arith.addf %90, %91 : vector<8x128xf32>
    %c0_47 = arith.constant 0 : index
    %c0_48 = arith.constant 0 : index
    %c512 = arith.constant 512 : index
    %93 = vector.load %arg5[%c0_47, %c0_48, %c512] : memref<1x8x1024xf32, #tpu.memory_space<vmem>>, vector<1x8x128xf32>
    %94 = vector.shape_cast %93 : vector<1x8x128xf32> to vector<8x128xf32>
    %95 = vector.shape_cast %92 : vector<8x128xf32> to vector<1x8x128xf32>
    tpu.vector_store %arg5[%c0_47, %c0_48, %c512], %95 {strides = array<i32>} : memref<1x8x1024xf32, #tpu.memory_space<vmem>>, vector<1x8x128xf32>,
    %96 = vector.extract_strided_slice %48 {offsets = [0, 1280], sizes = [8, 128], strides = [1, 1]} : vector<8x2048xf32> to vector<8x128xf32>
    %97 = vector.extract_strided_slice %48 {offsets = [0, 1408], sizes = [8, 128], strides = [1, 1]} : vector<8x2048xf32> to vector<8x128xf32>
    %98 = arith.addf %96, %97 : vector<8x128xf32>
    %cst_49 = arith.constant dense<0.000000e+00> : vector<8x128xf32>
    %99 = tpu.matmul %98, %49, %cst_49 {dimension_numbers = #tpu.dot_dimension_numbers<[1], [0], [0], [1], [0, 0, 1, 1], [], []>} : vector<8x128xf32>, vector<128x128xf32>, vector<8x128xf32> -> vector<8x128xf32>
    %100 = vector.broadcast %50 : vector<8x1xf32> to vector<8x128xf32>
    %101 = arith.addf %99, %100 : vector<8x128xf32>
    %c0_50 = arith.constant 0 : index
    %c0_51 = arith.constant 0 : index
    %c640 = arith.constant 640 : index
    %102 = vector.load %arg5[%c0_50, %c0_51, %c640] : memref<1x8x1024xf32, #tpu.memory_space<vmem>>, vector<1x8x128xf32>
    %103 = vector.shape_cast %102 : vector<1x8x128xf32> to vector<8x128xf32>
    %104 = vector.shape_cast %101 : vector<8x128xf32> to vector<1x8x128xf32>
    tpu.vector_store %arg5[%c0_50, %c0_51, %c640], %104 {strides = array<i32>} : memref<1x8x1024xf32, #tpu.memory_space<vmem>>, vector<1x8x128xf32>,
    %105 = vector.extract_strided_slice %48 {offsets = [0, 1536], sizes = [8, 128], strides = [1, 1]} : vector<8x2048xf32> to vector<8x128xf32>
    %106 = vector.extract_strided_slice %48 {offsets = [0, 1664], sizes = [8, 128], strides = [1, 1]} : vector<8x2048xf32> to vector<8x128xf32>
    %107 = arith.addf %105, %106 : vector<8x128xf32>
    %cst_52 = arith.constant dense<0.000000e+00> : vector<8x128xf32>
    %108 = tpu.matmul %107, %49, %cst_52 {dimension_numbers = #tpu.dot_dimension_numbers<[1], [0], [0], [1], [0, 0, 1, 1], [], []>} : vector<8x128xf32>, vector<128x128xf32>, vector<8x128xf32> -> vector<8x128xf32>
    %109 = vector.broadcast %50 : vector<8x1xf32> to vector<8x128xf32>
    %110 = arith.addf %108, %109 : vector<8x128xf32>
    %c0_53 = arith.constant 0 : index
    %c0_54 = arith.constant 0 : index
    %c768 = arith.constant 768 : index
    %111 = vector.load %arg5[%c0_53, %c0_54, %c768] : memref<1x8x1024xf32, #tpu.memory_space<vmem>>, vector<1x8x128xf32>
    %112 = vector.shape_cast %111 : vector<1x8x128xf32> to vector<8x128xf32>
    %113 = vector.shape_cast %110 : vector<8x128xf32> to vector<1x8x128xf32>
    tpu.vector_store %arg5[%c0_53, %c0_54, %c768], %113 {strides = array<i32>} : memref<1x8x1024xf32, #tpu.memory_space<vmem>>, vector<1x8x128xf32>,
    %114 = vector.extract_strided_slice %48 {offsets = [0, 1792], sizes = [8, 128], strides = [1, 1]} : vector<8x2048xf32> to vector<8x128xf32>
    %115 = vector.extract_strided_slice %48 {offsets = [0, 1920], sizes = [8, 128], strides = [1, 1]} : vector<8x2048xf32> to vector<8x128xf32>
    %116 = arith.addf %114, %115 : vector<8x128xf32>
    %cst_55 = arith.constant dense<0.000000e+00> : vector<8x128xf32>
    %117 = tpu.matmul %116, %49, %cst_55 {dimension_numbers = #tpu.dot_dimension_numbers<[1], [0], [0], [1], [0, 0, 1, 1], [], []>} : vector<8x128xf32>, vector<128x128xf32>, vector<8x128xf32> -> vector<8x128xf32>
    %118 = vector.broadcast %50 : vector<8x1xf32> to vector<8x128xf32>
    %119 = arith.addf %117, %118 : vector<8x128xf32>
    %c0_56 = arith.constant 0 : index
    %c0_57 = arith.constant 0 : index
    %c896 = arith.constant 896 : index
    %120 = vector.load %arg5[%c0_56, %c0_57, %c896] : memref<1x8x1024xf32, #tpu.memory_space<vmem>>, vector<1x8x128xf32>
    %121 = vector.shape_cast %120 : vector<1x8x128xf32> to vector<8x128xf32>
    %122 = vector.shape_cast %119 : vector<8x128xf32> to vector<1x8x128xf32>
    tpu.vector_store %arg5[%c0_56, %c0_57, %c896], %122 {strides = array<i32>} : memref<1x8x1024xf32, #tpu.memory_space<vmem>>, vector<1x8x128xf32>,
    return
  }
  func.func @transform_0(%arg0: i32) -> (i32, i32, i32) {
    %c0_i32 = arith.constant 0 : i32
    %c0_i32_0 = arith.constant 0 : i32
    %c0_i32_1 = arith.constant 0 : i32
    return %arg0, %c0_i32, %c0_i32_0 : i32, i32, i32
  }
  func.func @transform_1(%arg0: i32) -> (i32, i32, i32) {
    %c0_i32 = arith.constant 0 : i32
    %c0_i32_0 = arith.constant 0 : i32
    %c0_i32_1 = arith.constant 0 : i32
    %c0_i32_2 = arith.constant 0 : i32
    return %c0_i32, %c0_i32_0, %c0_i32_1 : i32, i32, i32
  }
  func.func @transform_2(%arg0: i32) -> (i32, i32) {
    %c0_i32 = arith.constant 0 : i32
    %c0_i32_0 = arith.constant 0 : i32
    %c0_i32_1 = arith.constant 0 : i32
    return %c0_i32, %c0_i32_0 : i32, i32
  }
  func.func @transform_3(%arg0: i32) -> (i32, i32) {
    %c0_i32 = arith.constant 0 : i32
    %c0_i32_0 = arith.constant 0 : i32
    %c0_i32_1 = arith.constant 0 : i32
    return %c0_i32, %c0_i32_0 : i32, i32
  }
  func.func @transform_4(%arg0: i32) -> (i32, i32, i32) {
    %c0_i32 = arith.constant 0 : i32
    %c0_i32_0 = arith.constant 0 : i32
    %c0_i32_1 = arith.constant 0 : i32
    return %arg0, %c0_i32, %c0_i32_0 : i32, i32, i32
  }
}

</mosaic_0001>

<llo_original>
// kernel: tpu_custom_call.1
$region0: #{tpu_custom_call.1}
  #allocation0 [shape = 'u32[]', space=smem, size = 0x4, offset = 0x4, fixed_abs, tag = 'smem constant byte address 0x4 - core index']
  #allocation1 [shape = 'u32[72,128]{1,0:T(1,128)}', space=vmem, size = 0x9000, scoped, tag = 'internal scratch']
  %s0 = inlined_call_operand.hbm [shape: bf16[2,8,2432], index: 0, kind: input, shape index: {}]
  %s1 = inlined_call_operand.vmem [shape: bf16[9,8,8], index: 1, kind: input, shape index: {}]
  %s2 = inlined_call_operand.hbm [shape: f32[128,128], index: 2, kind: input, shape index: {}]
  %s3 = inlined_call_operand.vmem [shape: f32[8,1], index: 3, kind: input, shape index: {}]
  %s4 = inlined_call_operand.hbm [shape: f32[2,8,1024], index: 4, kind: output, shape index: {}]
  %s5 = sld [smem:[#allocation0]]
  $region57: #{tpu_custom_call.1} parent=0
    _
  %s7 = ssub.s32 1, %s5
  %s8 = scalar_select 0, %s7, %s5
  $region1: #{tpu_custom_call.1} parent=0
    #allocation2 [shape = 'u8[77824]{0}', space=vmem, size = 0x13000, scoped, tag = 'input window, operand 0']
    #allocation3 [shape = 's32[2]{0}', space=sflag, size = 0x8, scoped, tag = 'scoped memory for tpu_custom_call.1']
    #allocation4 [shape = 's32[2]{0}', space=sflag, size = 0x8, scoped, tag = 'scoped memory for tpu_custom_call.1']
    #allocation5 [shape = 'u8[65536]{0}', space=vmem, size = 0x10000, scoped, tag = 'input window, operand 2, single buffered']
    #allocation6 [shape = 's32[1]{0}', space=sflag, size = 0x4, scoped, tag = 'scoped memory for tpu_custom_call.1']
    #allocation7 [shape = 'u8[65536]{0}', space=vmem, size = 0x10000, scoped, tag = 'output window, operand 0']
    %9 = vsyncpa [#allocation3], 0
    %s10 = scalar_lea.sflag [#allocation3], 1
    %11 = vsyncpa %s10, 0
    %12 = vsyncpa [#allocation6], 0
    %13 = vsyncpa [#allocation4], 0
    %s14 = scalar_lea.sflag [#allocation4], 1
    %15 = vsyncpa %s14, 0
    loop: start=0, step=1, limit=4
    $region2: #{tpu_custom_call.1} parent=1 // loop_pre_header
      _
    $region3: #{tpu_custom_call.1} parent=1 // loop_header
      %s17 = sphi 0, %s21
      %p18 = scmp.ge.s32.totalorder %s17, 4
      %s27 = sphi 0, %s29
      %s30 = sphi 0, %s27
      %s31 = sphi 0, %s30
      %s47 = sphi 0, %s31
      %s51 = sphi 0, %s51
      %s53 = sphi 0, %s51
      %s54 = sphi 0, %s53
      %s68 = sphi 0, %s54
      %s72 = sphi 0, %s72
      %s74 = sphi 0, %s72
      %s75 = sphi 0, %s74
      %s89 = sphi 0, %s75
      %s93 = sphi 0, %s93
      %s95 = sphi 0, %s93
      %s96 = sphi 0, %s95
      %s110 = sphi 0, %s96
      %s116 = sphi 0, %s118
      %s119 = sphi 0, %s116
      %s120 = sphi 0, %s119
      %s136 = sphi 0, %s120
    $region4: #{tpu_custom_call.1} parent=1 // loop_header_branch
      %20 = sbr.rel (%p18) target = $region8
    $region5: #{tpu_custom_call.1} parent=1 // loop_body
      %s22 = ssub.s32 %s17, 1
      %s23 = ssub.s32 %s17, 2
      %s24 = sadd.s32 %s17, 1
      %s25 = ssub.s32 %s17, %s24
      %p26 = scmp.eq.s32.totalorder %s25, 0
      %s28 = sadd.s32 %s27, 1
      %s29 = scalar_select %p26, %s27, %s28
      %p32 = pneg %p26
      %p33 = scmp.eq.s32.totalorder %s17, 1
      %p34 = por %p32, %p33
      %p35 = scmp.ne.s32.totalorder %s27, %s30
      %p36 = scmp.eq.s32.totalorder %s17, 0
      %p37 = por %p35, %p36
      %p38 = scmp.ne.s32.totalorder %s27, %s30
      %p39 = scmp.eq.s32.totalorder %s22, 1
      %p40 = por %p38, %p39
      %p41 = scmp.ne.s32.totalorder %s30, %s31
      %p42 = scmp.eq.s32.totalorder %s22, 0
      %p43 = por %p41, %p42
      %p44 = scmp.ne.s32.totalorder %s30, %s31
      %p45 = scmp.eq.s32.totalorder %s23, 1
      %p46 = por %p44, %p45
      %p48 = scmp.ne.s32.totalorder %s31, %s47
      %p49 = scmp.eq.s32.totalorder %s23, 0
      %p50 = por %p48, %p49
      %s52 = sadd.s32 %s51, 1
      %p55 = scmp.eq.s32.totalorder %s17, 1
      %p56 = scmp.ne.s32.totalorder %s51, %s53
      %p57 = scmp.eq.s32.totalorder %s17, 0
      %p58 = por %p56, %p57
      %p59 = scmp.ne.s32.totalorder %s51, %s53
      %p60 = scmp.eq.s32.totalorder %s22, 1
      %p61 = por %p59, %p60
      %p62 = scmp.ne.s32.totalorder %s53, %s54
      %p63 = scmp.eq.s32.totalorder %s22, 0
      %p64 = por %p62, %p63
      %p65 = scmp.ne.s32.totalorder %s53, %s54
      %p66 = scmp.eq.s32.totalorder %s23, 1
      %p67 = por %p65, %p66
      %p69 = scmp.ne.s32.totalorder %s54, %s68
      %p70 = scmp.eq.s32.totalorder %s23, 0
      %p71 = por %p69, %p70
      %s73 = sadd.s32 %s72, 1
      %p76 = scmp.eq.s32.totalorder %s17, 1
      %p77 = scmp.ne.s32.totalorder %s72, %s74
      %p78 = scmp.eq.s32.totalorder %s17, 0
      %p79 = por %p77, %p78
      %p80 = scmp.ne.s32.totalorder %s72, %s74
      %p81 = scmp.eq.s32.totalorder %s22, 1
      %p82 = por %p80, %p81
      %p83 = scmp.ne.s32.totalorder %s74, %s75
      %p84 = scmp.eq.s32.totalorder %s22, 0
      %p85 = por %p83, %p84
      %p86 = scmp.ne.s32.totalorder %s74, %s75
      %p87 = scmp.eq.s32.totalorder %s23, 1
      %p88 = por %p86, %p87
      %p90 = scmp.ne.s32.totalorder %s75, %s89
      %p91 = scmp.eq.s32.totalorder %s23, 0
      %p92 = por %p90, %p91
      %s94 = sadd.s32 %s93, 1
      %p97 = scmp.eq.s32.totalorder %s17, 1
      %p98 = scmp.ne.s32.totalorder %s93, %s95
      %p99 = scmp.eq.s32.totalorder %s17, 0
      %p100 = por %p98, %p99
      %p101 = scmp.ne.s32.totalorder %s93, %s95
      %p102 = scmp.eq.s32.totalorder %s22, 1
      %p103 = por %p101, %p102
      %p104 = scmp.ne.s32.totalorder %s95, %s96
      %p105 = scmp.eq.s32.totalorder %s22, 0
      %p106 = por %p104, %p105
      %p107 = scmp.ne.s32.totalorder %s95, %s96
      %p108 = scmp.eq.s32.totalorder %s23, 1
      %p109 = por %p107, %p108
      %p111 = scmp.ne.s32.totalorder %s96, %s110
      %p112 = scmp.eq.s32.totalorder %s23, 0
      %p113 = por %p111, %p112
      %s114 = ssub.s32 %s17, %s24
      %p115 = scmp.eq.s32.totalorder %s114, 0
      %s117 = sadd.s32 %s116, 1
      %s118 = scalar_select %p115, %s116, %s117
      %p121 = pneg %p115
      %p122 = scmp.eq.s32.totalorder %s17, 1
      %p123 = por %p121, %p122
      %p124 = scmp.ne.s32.totalorder %s116, %s119
      %p125 = scmp.eq.s32.totalorder %s17, 0
      %p126 = por %p124, %p125
      %p127 = scmp.ne.s32.totalorder %s116, %s119
      %p128 = scmp.eq.s32.totalorder %s22, 1
      %p129 = por %p127, %p128
      %p130 = scmp.ne.s32.totalorder %s119, %s120
      %p131 = scmp.eq.s32.totalorder %s22, 0
      %p132 = por %p130, %p131
      %p133 = scmp.ne.s32.totalorder %s119, %s120
      %p134 = scmp.eq.s32.totalorder %s23, 1
      %p135 = por %p133, %p134
      %p137 = scmp.ne.s32.totalorder %s120, %s136
      %p138 = scmp.eq.s32.totalorder %s23, 0
      %p139 = por %p137, %p138
      %p140 = scmp.le.s32.totalorder 1, %s17
      %p141 = scmp.lt.s32.totalorder %s17, 3
      %p142 = pnand %p140, %p141
      %p143 = pneg %p142
      // Predicated region
      $region9: #{tpu_custom_call.1} parent=5 // pred_check
        _
      $region10: #{tpu_custom_call.1} parent=5 // pred_check_branch
        %145 = sbr.rel (%p142) target = $region12
      $region11: #{tpu_custom_call.1} parent=5 // pred_region
        %s146 = ssub.s32 %s17, 1
        // Predicated region
        $region13: #{tpu_custom_call.1} parent=11 // pred_check
          %p147 = pneg %p64
        $region14: #{tpu_custom_call.1} parent=11 // pred_check_branch
          %149 = sbr.rel (%p147) target = $region16
        $region15: #{tpu_custom_call.1} parent=11 // pred_region
          _
        $region16: #{tpu_custom_call.1} parent=11 // pred_fallthru
          _
        // Predicated region
        $region17: #{tpu_custom_call.1} parent=11 // pred_check
          %p150 = pneg %p85
        $region18: #{tpu_custom_call.1} parent=11 // pred_check_branch
          %152 = sbr.rel (%p150) target = $region20
        $region19: #{tpu_custom_call.1} parent=11 // pred_region
          %154 = vsyncadd [#allocation6], 0
          %s155 = sshll.u32 %s2, 4
          %s156 = int_to_ptr.hbm [resolvable:$true] %s155
          %s157 = sshll.u32 [#allocation5], 4
          %s158 = int_to_ptr.vmem [resolvable:$true] %s157
          %163 = dma.hbm_to_vmem [thread:$0]  %s156, 2048, %s158, [#allocation6], 128, 128, 8
        $region20: #{tpu_custom_call.1} parent=11 // pred_fallthru
          _
        // Predicated region
        $region21: #{tpu_custom_call.1} parent=11 // pred_check
          %p164 = pneg %p106
        $region22: #{tpu_custom_call.1} parent=11 // pred_check_branch
          %166 = sbr.rel (%p164) target = $region24
        $region23: #{tpu_custom_call.1} parent=11 // pred_region
          _
        $region24: #{tpu_custom_call.1} parent=11 // pred_fallthru
          _
      $region12: #{tpu_custom_call.1} parent=5 // pred_fallthru
        _
      %p167 = scmp.lt.s32.totalorder %s17, 2
      // Predicated region
      $region25: #{tpu_custom_call.1} parent=5 // pred_check
        %p168 = pneg %p167
      $region26: #{tpu_custom_call.1} parent=5 // pred_check_branch
        %170 = sbr.rel (%p168) target = $region28
      $region27: #{tpu_custom_call.1} parent=5 // pred_region
        // Predicated region
        $region29: #{tpu_custom_call.1} parent=27 // pred_check
          %p171 = pneg %p37
        $region30: #{tpu_custom_call.1} parent=27 // pred_check_branch
          %173 = sbr.rel (%p171) target = $region32
        $region31: #{tpu_custom_call.1} parent=27 // pred_region
          %s174 = sand.u32 %s27, 1
          %s175 = scalar_lea.sflag [#allocation3], %s174
          %s176 = sand.u32 %s27, 1
          %s177 = smul.addr %s176, 76
          %s178 = scalar_lea.vmem [#allocation2], %s177
          %180 = vsyncadd %s175, 0
          %s181 = smul.addr %s17, 19
          %s182 = smul.addr %s181, 4
          %s183 = scalar_lea.hbm %s0, %s182
          %s185 = sshll.u32 %s183, 4
          %s186 = int_to_ptr.hbm [resolvable:$true] %s185
          %s187 = sshll.u32 %s178, 4
          %s188 = int_to_ptr.vmem [resolvable:$true] %s187
          %190 = dma.hbm_to_vmem [thread:$0]  %s186, 1216, %s188, %s175
        $region32: #{tpu_custom_call.1} parent=27 // pred_fallthru
          _
      $region28: #{tpu_custom_call.1} parent=5 // pred_fallthru
        _
      %p191 = scmp.le.s32.totalorder 1, %s17
      %p192 = scmp.lt.s32.totalorder %s17, 3
      %p193 = pnand %p191, %p192
      %p194 = pneg %p193
      // Predicated region
      $region33: #{tpu_custom_call.1} parent=5 // pred_check
        _
      $region34: #{tpu_custom_call.1} parent=5 // pred_check_branch
        %196 = sbr.rel (%p193) target = $region36
      $region35: #{tpu_custom_call.1} parent=5 // pred_region
        %s197 = ssub.s32 %s17, 1
        %s198 = sand.u32 %s30, 1
        %s199 = scalar_lea.sflag [#allocation3], %s198
        %s200 = sand.u32 %s30, 1
        %s201 = smul.addr %s200, 76
        %s202 = scalar_lea.vmem [#allocation2], %s201
        // Predicated region
        $region37: #{tpu_custom_call.1} parent=35 // pred_check
          %p203 = pneg %p43
        $region38: #{tpu_custom_call.1} parent=35 // pred_check_branch
          %205 = sbr.rel (%p203) target = $region40
        $region39: #{tpu_custom_call.1} parent=35 // pred_region
          %207 = dma.done %s199, 1216
        $region40: #{tpu_custom_call.1} parent=35 // pred_fallthru
          _
        // Predicated region
        $region41: #{tpu_custom_call.1} parent=35 // pred_check
          %p208 = pneg %p85
        $region42: #{tpu_custom_call.1} parent=35 // pred_check_branch
          %210 = sbr.rel (%p208) target = $region44
        $region43: #{tpu_custom_call.1} parent=35 // pred_region
          %212 = dma.done [#allocation6], 2048
        $region44: #{tpu_custom_call.1} parent=35 // pred_fallthru
          _
        %s213 = sand.u32 %s30, 1
        %s214 = scalar_lea.sflag [#allocation3], %s213
        %s215 = sand.u32 %s30, 1
        %s216 = smul.addr %s215, 76
        %s217 = scalar_lea.vmem [#allocation2], %s216
        %p218 = pneg %p43
        %p219 = pneg %p40
        %p220 = pneg %p64
        %p221 = pneg %p61
        %p222 = pneg %p85
        %p223 = pneg %p82
        %p224 = pneg %p106
        %p225 = pneg %p103
        %p226 = pneg %p132
        %p227 = pneg %p129
        %s228 = sand.u32 %s119, 1
        %s229 = scalar_lea.sflag [#allocation4], %s228
        %s230 = sand.u32 %s119, 1
        %s231 = smul.addr %s230, 64
        %s232 = scalar_lea.vmem [#allocation7], %s231
        %v234 = vld [vmem:[%s202] sm:$0xff]
        %v235 = vld [vmem:[%s202 + $0x8] sm:$0xff]
        %v236 = vld [vmem:[%s202 + $0x10] sm:$0xff]
        %v237 = vld [vmem:[%s202 + $0x18] sm:$0xff]
        %v238 = vld [vmem:[%s202 + $0x20] sm:$0xff]
        %v239 = vld [vmem:[%s202 + $0x28] sm:$0xff]
        %v240 = vld [vmem:[%s202 + $0x30] sm:$0xff]
        %v241 = vld [vmem:[%s202 + $0x38] sm:$0xff]
        %v242 = vld [vmem:[%s202 + $0x40] sm:$0xff]
        %v243 = vld [vmem:[%s202 + $0x48] sm:$0xf]
        %v244 = vld [vmem:[%s1] sm:$0xf]
        %s245 = scalar_lea.vmem %s1, 4
        %v246 = vld [vmem:[%s245] sm:$0xf]
        %v256 = vunpack.c.l.b16 %v234
        %v257 = vunpack.c.h.b16 %v234
        %v258 = vunpack.c.l.b16 %v235
        %v259 = vunpack.c.h.b16 %v235
        %v260 = vunpack.c.l.b16 %v236
        %v261 = vunpack.c.h.b16 %v236
        %v262 = vunpack.c.l.b16 %v237
        %v263 = vunpack.c.h.b16 %v237
        %v264 = vunpack.c.l.b16 %v238
        %v265 = vunpack.c.h.b16 %v238
        %v266 = vunpack.c.l.b16 %v239
        %v267 = vunpack.c.h.b16 %v239
        %v268 = vunpack.c.l.b16 %v240
        %v269 = vunpack.c.h.b16 %v240
        %v270 = vunpack.c.l.b16 %v241
        %v271 = vunpack.c.h.b16 %v241
        %v272 = vunpack.c.l.b16 %v242
        %v273 = vpack.c.b16 %v256, %v256
        %v274 = vpack.c.b16 %v257, %v257
        %v275 = vpack.c.b16 %v258, %v258
        %v276 = vpack.c.b16 %v259, %v259
        %v277 = vpack.c.b16 %v260, %v260
        %v278 = vpack.c.b16 %v261, %v261
        %v279 = vpack.c.b16 %v262, %v262
        %v280 = vpack.c.b16 %v263, %v263
        %v281 = vpack.c.b16 %v264, %v264
        %v282 = vpack.c.b16 %v265, %v265
        %v283 = vpack.c.b16 %v266, %v266
        %v284 = vpack.c.b16 %v267, %v267
        %v285 = vpack.c.b16 %v268, %v268
        %v286 = vpack.c.b16 %v269, %v269
        %v287 = vpack.c.b16 %v270, %v270
        %v288 = vpack.c.b16 %v271, %v271
        %v289 = vpack.c.b16 %v272, %v272
        %290 = vrot.lane.b32.xlu0 %v273, 127
        %v291 = vpop.permute.xlu0 %290
        %292 = vrot.lane.b32.xlu0 %v274, 127
        %v293 = vpop.permute.xlu0 %292
        %294 = vrot.lane.b32.xlu0 %v275, 127
        %v295 = vpop.permute.xlu0 %294
        %296 = vrot.lane.b32.xlu0 %v276, 127
        %v297 = vpop.permute.xlu0 %296
        %298 = vrot.lane.b32.xlu0 %v277, 127
        %v299 = vpop.permute.xlu0 %298
        %300 = vrot.lane.b32.xlu0 %v278, 127
        %v301 = vpop.permute.xlu0 %300
        %302 = vrot.lane.b32.xlu0 %v279, 127
        %v303 = vpop.permute.xlu0 %302
        %304 = vrot.lane.b32.xlu0 %v280, 127
        %v305 = vpop.permute.xlu0 %304
        %306 = vrot.lane.b32.xlu0 %v281, 127
        %v307 = vpop.permute.xlu0 %306
        %308 = vrot.lane.b32.xlu0 %v282, 127
        %v309 = vpop.permute.xlu0 %308
        %310 = vrot.lane.b32.xlu0 %v283, 127
        %v311 = vpop.permute.xlu0 %310
        %312 = vrot.lane.b32.xlu0 %v284, 127
        %v313 = vpop.permute.xlu0 %312
        %314 = vrot.lane.b32.xlu0 %v285, 127
        %v315 = vpop.permute.xlu0 %314
        %316 = vrot.lane.b32.xlu0 %v286, 127
        %v317 = vpop.permute.xlu0 %316
        %318 = vrot.lane.b32.xlu0 %v287, 127
        %v319 = vpop.permute.xlu0 %318
        %320 = vrot.lane.b32.xlu0 %v288, 127
        %v321 = vpop.permute.xlu0 %320
        %322 = vrot.lane.b32.xlu0 %v289, 127
        %v323 = vpop.permute.xlu0 %322
        %vm324 = vcmask 1039360
        %v325 = vsel %vm324, %v291, %v293
        %v326 = vsel %vm324, %v293, %v295
        %v327 = vsel %vm324, %v295, %v297
        %v328 = vsel %vm324, %v297, %v299
        %v329 = vsel %vm324, %v299, %v301
        %v330 = vsel %vm324, %v301, %v303
        %v331 = vsel %vm324, %v303, %v305
        %v332 = vsel %vm324, %v305, %v307
        %v333 = vsel %vm324, %v307, %v309
        %v334 = vsel %vm324, %v309, %v311
        %v335 = vsel %vm324, %v311, %v313
        %v336 = vsel %vm324, %v313, %v315
        %v337 = vsel %vm324, %v315, %v317
        %v338 = vsel %vm324, %v317, %v319
        %v339 = vsel %vm324, %v319, %v321
        %v340 = vsel %vm324, %v321, %v323
        %vm341 = vcmask 64512
        %v343 = vsel %vm341, %v246, 0
        %vm345 = vcmask 1043456
        %v347 = vsel %vm345, %v325, 0
        %v350 = vsel %vm345, %v326, 0
        %v353 = vsel %vm345, %v327, 0
        %v356 = vsel %vm345, %v328, 0
        %v359 = vsel %vm345, %v329, 0
        %v362 = vsel %vm345, %v330, 0
        %v365 = vsel %vm345, %v331, 0
        %v368 = vsel %vm345, %v332, 0
        %v371 = vsel %vm345, %v333, 0
        %v374 = vsel %vm345, %v334, 0
        %v377 = vsel %vm345, %v335, 0
        %v380 = vsel %vm345, %v336, 0
        %v383 = vsel %vm345, %v337, 0
        %v386 = vsel %vm345, %v338, 0
        %v389 = vsel %vm345, %v339, 0
        %v392 = vsel %vm345, %v340, 0
        %394 = vmatpush.bf16.msra.mxu0 0
        %395 = vmatpush.bf16.msra.mxu0 0
        %396 = vmatpush.bf16.msra.mxu0 0
        %397 = vmatpush.bf16.msra.mxu0 0
        %398 = vmatpush.bf16.msra.mxu0 0
        %399 = vmatpush.bf16.msra.mxu0 0
        %400 = vmatpush.bf16.msra.mxu0 0
        %401 = vmatpush.bf16.msra.mxu0 %v347
        %402 = vmatmul.bf16.gmra.mxu0 %v343
        %v403 = vpop.f32.mrf.mxu0
        %v404 = vadd.f32 0.0, %v403
        %v405 = vpop.f32.mrf.mxu0
        %406 = vdwg.mxu0
        %407 = vmatpush.bf16.msra.mxu0 0
        %408 = vmatpush.bf16.msra.mxu0 0
        %409 = vmatpush.bf16.msra.mxu0 0
        %410 = vmatpush.bf16.msra.mxu0 0
        %411 = vmatpush.bf16.msra.mxu0 0
        %412 = vmatpush.bf16.msra.mxu0 0
        %413 = vmatpush.bf16.msra.mxu0 0
        %414 = vmatpush.bf16.msra.mxu0 %v350
        %415 = vmatmul.bf16.gmra.mxu0 %v343
        %v416 = vpop.f32.mrf.mxu0
        %v417 = vadd.f32 0.0, %v416
        %v418 = vpop.f32.mrf.mxu0
        %419 = vdwg.mxu0
        %420 = vmatpush.bf16.msra.mxu0 0
        %421 = vmatpush.bf16.msra.mxu0 0
        %422 = vmatpush.bf16.msra.mxu0 0
        %423 = vmatpush.bf16.msra.mxu0 0
        %424 = vmatpush.bf16.msra.mxu0 0
        %425 = vmatpush.bf16.msra.mxu0 0
        %426 = vmatpush.bf16.msra.mxu0 0
        %427 = vmatpush.bf16.msra.mxu0 %v353
        %428 = vmatmul.bf16.gmra.mxu0 %v343
        %v429 = vpop.f32.mrf.mxu0
        %v430 = vadd.f32 0.0, %v429
        %v431 = vpop.f32.mrf.mxu0
        %432 = vdwg.mxu0
        %433 = vmatpush.bf16.msra.mxu0 0
        %434 = vmatpush.bf16.msra.mxu0 0
        %435 = vmatpush.bf16.msra.mxu0 0
        %436 = vmatpush.bf16.msra.mxu0 0
        %437 = vmatpush.bf16.msra.mxu0 0
        %438 = vmatpush.bf16.msra.mxu0 0
        %439 = vmatpush.bf16.msra.mxu0 0
        %440 = vmatpush.bf16.msra.mxu0 %v356
        %441 = vmatmul.bf16.gmra.mxu0 %v343
        %v442 = vpop.f32.mrf.mxu0
        %v443 = vadd.f32 0.0, %v442
        %v444 = vpop.f32.mrf.mxu0
        %445 = vdwg.mxu0
        %446 = vmatpush.bf16.msra.mxu0 0
        %447 = vmatpush.bf16.msra.mxu0 0
        %448 = vmatpush.bf16.msra.mxu0 0
        %449 = vmatpush.bf16.msra.mxu0 0
        %450 = vmatpush.bf16.msra.mxu0 0
        %451 = vmatpush.bf16.msra.mxu0 0
        %452 = vmatpush.bf16.msra.mxu0 0
        %453 = vmatpush.bf16.msra.mxu0 %v359
        %454 = vmatmul.bf16.gmra.mxu0 %v343
        %v455 = vpop.f32.mrf.mxu0
        %v456 = vadd.f32 0.0, %v455
        %v457 = vpop.f32.mrf.mxu0
        %458 = vdwg.mxu0
        %459 = vmatpush.bf16.msra.mxu0 0
        %460 = vmatpush.bf16.msra.mxu0 0
        %461 = vmatpush.bf16.msra.mxu0 0
        %462 = vmatpush.bf16.msra.mxu0 0
        %463 = vmatpush.bf16.msra.mxu0 0
        %464 = vmatpush.bf16.msra.mxu0 0
        %465 = vmatpush.bf16.msra.mxu0 0
        %466 = vmatpush.bf16.msra.mxu0 %v362
        %467 = vmatmul.bf16.gmra.mxu0 %v343
        %v468 = vpop.f32.mrf.mxu0
        %v469 = vadd.f32 0.0, %v468
        %v470 = vpop.f32.mrf.mxu0
        %471 = vdwg.mxu0
        %472 = vmatpush.bf16.msra.mxu0 0
        %473 = vmatpush.bf16.msra.mxu0 0
        %474 = vmatpush.bf16.msra.mxu0 0
        %475 = vmatpush.bf16.msra.mxu0 0
        %476 = vmatpush.bf16.msra.mxu0 0
        %477 = vmatpush.bf16.msra.mxu0 0
        %478 = vmatpush.bf16.msra.mxu0 0
        %479 = vmatpush.bf16.msra.mxu0 %v365
        %480 = vmatmul.bf16.gmra.mxu0 %v343
        %v481 = vpop.f32.mrf.mxu0
        %v482 = vadd.f32 0.0, %v481
        %v483 = vpop.f32.mrf.mxu0
        %484 = vdwg.mxu0
        %485 = vmatpush.bf16.msra.mxu0 0
        %486 = vmatpush.bf16.msra.mxu0 0
        %487 = vmatpush.bf16.msra.mxu0 0
        %488 = vmatpush.bf16.msra.mxu0 0
        %489 = vmatpush.bf16.msra.mxu0 0
        %490 = vmatpush.bf16.msra.mxu0 0
        %491 = vmatpush.bf16.msra.mxu0 0
        %492 = vmatpush.bf16.msra.mxu0 %v368
        %493 = vmatmul.bf16.gmra.mxu0 %v343
        %v494 = vpop.f32.mrf.mxu0
        %v495 = vadd.f32 0.0, %v494
        %v496 = vpop.f32.mrf.mxu0
        %497 = vdwg.mxu0
        %498 = vmatpush.bf16.msra.mxu0 0
        %499 = vmatpush.bf16.msra.mxu0 0
        %500 = vmatpush.bf16.msra.mxu0 0
        %501 = vmatpush.bf16.msra.mxu0 0
        %502 = vmatpush.bf16.msra.mxu0 0
        %503 = vmatpush.bf16.msra.mxu0 0
        %504 = vmatpush.bf16.msra.mxu0 0
        %505 = vmatpush.bf16.msra.mxu0 %v371
        %506 = vmatmul.bf16.gmra.mxu0 %v343
        %v507 = vpop.f32.mrf.mxu0
        %v508 = vadd.f32 0.0, %v507
        %v509 = vpop.f32.mrf.mxu0
        %510 = vdwg.mxu0
        %511 = vmatpush.bf16.msra.mxu0 0
        %512 = vmatpush.bf16.msra.mxu0 0
        %513 = vmatpush.bf16.msra.mxu0 0
        %514 = vmatpush.bf16.msra.mxu0 0
        %515 = vmatpush.bf16.msra.mxu0 0
        %516 = vmatpush.bf16.msra.mxu0 0
        %517 = vmatpush.bf16.msra.mxu0 0
        %518 = vmatpush.bf16.msra.mxu0 %v374
        %519 = vmatmul.bf16.gmra.mxu0 %v343
        %v520 = vpop.f32.mrf.mxu0
        %v521 = vadd.f32 0.0, %v520
        %v522 = vpop.f32.mrf.mxu0
        %523 = vdwg.mxu0
        %524 = vmatpush.bf16.msra.mxu0 0
        %525 = vmatpush.bf16.msra.mxu0 0
        %526 = vmatpush.bf16.msra.mxu0 0
        %527 = vmatpush.bf16.msra.mxu0 0
        %528 = vmatpush.bf16.msra.mxu0 0
        %529 = vmatpush.bf16.msra.mxu0 0
        %530 = vmatpush.bf16.msra.mxu0 0
        %531 = vmatpush.bf16.msra.mxu0 %v377
        %532 = vmatmul.bf16.gmra.mxu0 %v343
        %v533 = vpop.f32.mrf.mxu0
        %v534 = vadd.f32 0.0, %v533
        %v535 = vpop.f32.mrf.mxu0
        %536 = vdwg.mxu0
        %537 = vmatpush.bf16.msra.mxu0 0
        %538 = vmatpush.bf16.msra.mxu0 0
        %539 = vmatpush.bf16.msra.mxu0 0
        %540 = vmatpush.bf16.msra.mxu0 0
        %541 = vmatpush.bf16.msra.mxu0 0
        %542 = vmatpush.bf16.msra.mxu0 0
        %543 = vmatpush.bf16.msra.mxu0 0
        %544 = vmatpush.bf16.msra.mxu0 %v380
        %545 = vmatmul.bf16.gmra.mxu0 %v343
        %v546 = vpop.f32.mrf.mxu0
        %v547 = vadd.f32 0.0, %v546
        %v548 = vpop.f32.mrf.mxu0
        %549 = vdwg.mxu0
        %550 = vmatpush.bf16.msra.mxu0 0
        %551 = vmatpush.bf16.msra.mxu0 0
        %552 = vmatpush.bf16.msra.mxu0 0
        %553 = vmatpush.bf16.msra.mxu0 0
        %554 = vmatpush.bf16.msra.mxu0 0
        %555 = vmatpush.bf16.msra.mxu0 0
        %556 = vmatpush.bf16.msra.mxu0 0
        %557 = vmatpush.bf16.msra.mxu0 %v383
        %558 = vmatmul.bf16.gmra.mxu0 %v343
        %v559 = vpop.f32.mrf.mxu0
        %v560 = vadd.f32 0.0, %v559
        %v561 = vpop.f32.mrf.mxu0
        %562 = vdwg.mxu0
        %563 = vmatpush.bf16.msra.mxu0 0
        %564 = vmatpush.bf16.msra.mxu0 0
        %565 = vmatpush.bf16.msra.mxu0 0
        %566 = vmatpush.bf16.msra.mxu0 0
        %567 = vmatpush.bf16.msra.mxu0 0
        %568 = vmatpush.bf16.msra.mxu0 0
        %569 = vmatpush.bf16.msra.mxu0 0
        %570 = vmatpush.bf16.msra.mxu0 %v386
        %571 = vmatmul.bf16.gmra.mxu0 %v343
        %v572 = vpop.f32.mrf.mxu0
        %v573 = vadd.f32 0.0, %v572
        %v574 = vpop.f32.mrf.mxu0
        %575 = vdwg.mxu0
        %576 = vmatpush.bf16.msra.mxu0 0
        %577 = vmatpush.bf16.msra.mxu0 0
        %578 = vmatpush.bf16.msra.mxu0 0
        %579 = vmatpush.bf16.msra.mxu0 0
        %580 = vmatpush.bf16.msra.mxu0 0
        %581 = vmatpush.bf16.msra.mxu0 0
        %582 = vmatpush.bf16.msra.mxu0 0
        %583 = vmatpush.bf16.msra.mxu0 %v389
        %584 = vmatmul.bf16.gmra.mxu0 %v343
        %v585 = vpop.f32.mrf.mxu0
        %v586 = vadd.f32 0.0, %v585
        %v587 = vpop.f32.mrf.mxu0
        %588 = vdwg.mxu0
        %589 = vmatpush.bf16.msra.mxu0 0
        %590 = vmatpush.bf16.msra.mxu0 0
        %591 = vmatpush.bf16.msra.mxu0 0
        %592 = vmatpush.bf16.msra.mxu0 0
        %593 = vmatpush.bf16.msra.mxu0 0
        %594 = vmatpush.bf16.msra.mxu0 0
        %595 = vmatpush.bf16.msra.mxu0 0
        %596 = vmatpush.bf16.msra.mxu0 %v392
        %597 = vmatmul.bf16.gmra.mxu0 %v343
        %v598 = vpop.f32.mrf.mxu0
        %v599 = vadd.f32 0.0, %v598
        %v600 = vpop.f32.mrf.mxu0
        %601 = vdwg.mxu0
        %v603 = vsel %vm341, %v244, 0
        %v606 = vsel %vm345, %v273, 0
        %v609 = vsel %vm345, %v274, 0
        %v612 = vsel %vm345, %v275, 0
        %v615 = vsel %vm345, %v276, 0
        %v618 = vsel %vm345, %v277, 0
        %v621 = vsel %vm345, %v278, 0
        %v624 = vsel %vm345, %v279, 0
        %v627 = vsel %vm345, %v280, 0
        %v630 = vsel %vm345, %v281, 0
        %v633 = vsel %vm345, %v282, 0
        %v636 = vsel %vm345, %v283, 0
        %v639 = vsel %vm345, %v284, 0
        %v642 = vsel %vm345, %v285, 0
        %v645 = vsel %vm345, %v286, 0
        %v648 = vsel %vm345, %v287, 0
        %v651 = vsel %vm345, %v288, 0
        %653 = vmatpush.bf16.msra.mxu0 0
        %654 = vmatpush.bf16.msra.mxu0 0
        %655 = vmatpush.bf16.msra.mxu0 0
        %656 = vmatpush.bf16.msra.mxu0 0
        %657 = vmatpush.bf16.msra.mxu0 0
        %658 = vmatpush.bf16.msra.mxu0 0
        %659 = vmatpush.bf16.msra.mxu0 0
        %660 = vmatpush.bf16.msra.mxu0 %v606
        %661 = vmatmul.bf16.gmra.mxu0 %v603
        %v662 = vpop.f32.mrf.mxu0
        %v663 = vadd.f32 %v404, %v662
        %v664 = vpop.f32.mrf.mxu0
        %665 = vdwg.mxu0
        %666 = vmatpush.bf16.msra.mxu0 0
        %667 = vmatpush.bf16.msra.mxu0 0
        %668 = vmatpush.bf16.msra.mxu0 0
        %669 = vmatpush.bf16.msra.mxu0 0
        %670 = vmatpush.bf16.msra.mxu0 0
        %671 = vmatpush.bf16.msra.mxu0 0
        %672 = vmatpush.bf16.msra.mxu0 0
        %673 = vmatpush.bf16.msra.mxu0 %v609
        %674 = vmatmul.bf16.gmra.mxu0 %v603
        %v675 = vpop.f32.mrf.mxu0
        %v676 = vadd.f32 %v417, %v675
        %v677 = vpop.f32.mrf.mxu0
        %678 = vdwg.mxu0
        %679 = vmatpush.bf16.msra.mxu0 0
        %680 = vmatpush.bf16.msra.mxu0 0
        %681 = vmatpush.bf16.msra.mxu0 0
        %682 = vmatpush.bf16.msra.mxu0 0
        %683 = vmatpush.bf16.msra.mxu0 0
        %684 = vmatpush.bf16.msra.mxu0 0
        %685 = vmatpush.bf16.msra.mxu0 0
        %686 = vmatpush.bf16.msra.mxu0 %v612
        %687 = vmatmul.bf16.gmra.mxu0 %v603
        %v688 = vpop.f32.mrf.mxu0
        %v689 = vadd.f32 %v430, %v688
        %v690 = vpop.f32.mrf.mxu0
        %691 = vdwg.mxu0
        %692 = vmatpush.bf16.msra.mxu0 0
        %693 = vmatpush.bf16.msra.mxu0 0
        %694 = vmatpush.bf16.msra.mxu0 0
        %695 = vmatpush.bf16.msra.mxu0 0
        %696 = vmatpush.bf16.msra.mxu0 0
        %697 = vmatpush.bf16.msra.mxu0 0
        %698 = vmatpush.bf16.msra.mxu0 0
        %699 = vmatpush.bf16.msra.mxu0 %v615
        %700 = vmatmul.bf16.gmra.mxu0 %v603
        %v701 = vpop.f32.mrf.mxu0
        %v702 = vadd.f32 %v443, %v701
        %v703 = vpop.f32.mrf.mxu0
        %704 = vdwg.mxu0
        %705 = vmatpush.bf16.msra.mxu0 0
        %706 = vmatpush.bf16.msra.mxu0 0
        %707 = vmatpush.bf16.msra.mxu0 0
        %708 = vmatpush.bf16.msra.mxu0 0
        %709 = vmatpush.bf16.msra.mxu0 0
        %710 = vmatpush.bf16.msra.mxu0 0
        %711 = vmatpush.bf16.msra.mxu0 0
        %712 = vmatpush.bf16.msra.mxu0 %v618
        %713 = vmatmul.bf16.gmra.mxu0 %v603
        %v714 = vpop.f32.mrf.mxu0
        %v715 = vadd.f32 %v456, %v714
        %v716 = vpop.f32.mrf.mxu0
        %717 = vdwg.mxu0
        %718 = vmatpush.bf16.msra.mxu0 0
        %719 = vmatpush.bf16.msra.mxu0 0
        %720 = vmatpush.bf16.msra.mxu0 0
        %721 = vmatpush.bf16.msra.mxu0 0
        %722 = vmatpush.bf16.msra.mxu0 0
        %723 = vmatpush.bf16.msra.mxu0 0
        %724 = vmatpush.bf16.msra.mxu0 0
        %725 = vmatpush.bf16.msra.mxu0 %v621
        %726 = vmatmul.bf16.gmra.mxu0 %v603
        %v727 = vpop.f32.mrf.mxu0
        %v728 = vadd.f32 %v469, %v727
        %v729 = vpop.f32.mrf.mxu0
        %730 = vdwg.mxu0
        %731 = vmatpush.bf16.msra.mxu0 0
        %732 = vmatpush.bf16.msra.mxu0 0
        %733 = vmatpush.bf16.msra.mxu0 0
        %734 = vmatpush.bf16.msra.mxu0 0
        %735 = vmatpush.bf16.msra.mxu0 0
        %736 = vmatpush.bf16.msra.mxu0 0
        %737 = vmatpush.bf16.msra.mxu0 0
        %738 = vmatpush.bf16.msra.mxu0 %v624
        %739 = vmatmul.bf16.gmra.mxu0 %v603
        %v740 = vpop.f32.mrf.mxu0
        %v741 = vadd.f32 %v482, %v740
        %v742 = vpop.f32.mrf.mxu0
        %743 = vdwg.mxu0
        %744 = vmatpush.bf16.msra.mxu0 0
        %745 = vmatpush.bf16.msra.mxu0 0
        %746 = vmatpush.bf16.msra.mxu0 0
        %747 = vmatpush.bf16.msra.mxu0 0
        %748 = vmatpush.bf16.msra.mxu0 0
        %749 = vmatpush.bf16.msra.mxu0 0
        %750 = vmatpush.bf16.msra.mxu0 0
        %751 = vmatpush.bf16.msra.mxu0 %v627
        %752 = vmatmul.bf16.gmra.mxu0 %v603
        %v753 = vpop.f32.mrf.mxu0
        %v754 = vadd.f32 %v495, %v753
        %v755 = vpop.f32.mrf.mxu0
        %756 = vdwg.mxu0
        %757 = vmatpush.bf16.msra.mxu0 0
        %758 = vmatpush.bf16.msra.mxu0 0
        %759 = vmatpush.bf16.msra.mxu0 0
        %760 = vmatpush.bf16.msra.mxu0 0
        %761 = vmatpush.bf16.msra.mxu0 0
        %762 = vmatpush.bf16.msra.mxu0 0
        %763 = vmatpush.bf16.msra.mxu0 0
        %764 = vmatpush.bf16.msra.mxu0 %v630
        %765 = vmatmul.bf16.gmra.mxu0 %v603
        %v766 = vpop.f32.mrf.mxu0
        %v767 = vadd.f32 %v508, %v766
        %v768 = vpop.f32.mrf.mxu0
        %769 = vdwg.mxu0
        %770 = vmatpush.bf16.msra.mxu0 0
        %771 = vmatpush.bf16.msra.mxu0 0
        %772 = vmatpush.bf16.msra.mxu0 0
        %773 = vmatpush.bf16.msra.mxu0 0
        %774 = vmatpush.bf16.msra.mxu0 0
        %775 = vmatpush.bf16.msra.mxu0 0
        %776 = vmatpush.bf16.msra.mxu0 0
        %777 = vmatpush.bf16.msra.mxu0 %v633
        %778 = vmatmul.bf16.gmra.mxu0 %v603
        %v779 = vpop.f32.mrf.mxu0
        %v780 = vadd.f32 %v521, %v779
        %v781 = vpop.f32.mrf.mxu0
        %782 = vdwg.mxu0
        %783 = vmatpush.bf16.msra.mxu0 0
        %784 = vmatpush.bf16.msra.mxu0 0
        %785 = vmatpush.bf16.msra.mxu0 0
        %786 = vmatpush.bf16.msra.mxu0 0
        %787 = vmatpush.bf16.msra.mxu0 0
        %788 = vmatpush.bf16.msra.mxu0 0
        %789 = vmatpush.bf16.msra.mxu0 0
        %790 = vmatpush.bf16.msra.mxu0 %v636
        %791 = vmatmul.bf16.gmra.mxu0 %v603
        %v792 = vpop.f32.mrf.mxu0
        %v793 = vadd.f32 %v534, %v792
        %v794 = vpop.f32.mrf.mxu0
        %795 = vdwg.mxu0
        %796 = vmatpush.bf16.msra.mxu0 0
        %797 = vmatpush.bf16.msra.mxu0 0
        %798 = vmatpush.bf16.msra.mxu0 0
        %799 = vmatpush.bf16.msra.mxu0 0
        %800 = vmatpush.bf16.msra.mxu0 0
        %801 = vmatpush.bf16.msra.mxu0 0
        %802 = vmatpush.bf16.msra.mxu0 0
        %803 = vmatpush.bf16.msra.mxu0 %v639
        %804 = vmatmul.bf16.gmra.mxu0 %v603
        %v805 = vpop.f32.mrf.mxu0
        %v806 = vadd.f32 %v547, %v805
        %v807 = vpop.f32.mrf.mxu0
        %808 = vdwg.mxu0
        %809 = vmatpush.bf16.msra.mxu0 0
        %810 = vmatpush.bf16.msra.mxu0 0
        %811 = vmatpush.bf16.msra.mxu0 0
        %812 = vmatpush.bf16.msra.mxu0 0
        %813 = vmatpush.bf16.msra.mxu0 0
        %814 = vmatpush.bf16.msra.mxu0 0
        %815 = vmatpush.bf16.msra.mxu0 0
        %816 = vmatpush.bf16.msra.mxu0 %v642
        %817 = vmatmul.bf16.gmra.mxu0 %v603
        %v818 = vpop.f32.mrf.mxu0
        %v819 = vadd.f32 %v560, %v818
        %v820 = vpop.f32.mrf.mxu0
        %821 = vdwg.mxu0
        %822 = vmatpush.bf16.msra.mxu0 0
        %823 = vmatpush.bf16.msra.mxu0 0
        %824 = vmatpush.bf16.msra.mxu0 0
        %825 = vmatpush.bf16.msra.mxu0 0
        %826 = vmatpush.bf16.msra.mxu0 0
        %827 = vmatpush.bf16.msra.mxu0 0
        %828 = vmatpush.bf16.msra.mxu0 0
        %829 = vmatpush.bf16.msra.mxu0 %v645
        %830 = vmatmul.bf16.gmra.mxu0 %v603
        %v831 = vpop.f32.mrf.mxu0
        %v832 = vadd.f32 %v573, %v831
        %v833 = vpop.f32.mrf.mxu0
        %834 = vdwg.mxu0
        %835 = vmatpush.bf16.msra.mxu0 0
        %836 = vmatpush.bf16.msra.mxu0 0
        %837 = vmatpush.bf16.msra.mxu0 0
        %838 = vmatpush.bf16.msra.mxu0 0
        %839 = vmatpush.bf16.msra.mxu0 0
        %840 = vmatpush.bf16.msra.mxu0 0
        %841 = vmatpush.bf16.msra.mxu0 0
        %842 = vmatpush.bf16.msra.mxu0 %v648
        %843 = vmatmul.bf16.gmra.mxu0 %v603
        %v844 = vpop.f32.mrf.mxu0
        %v845 = vadd.f32 %v586, %v844
        %v846 = vpop.f32.mrf.mxu0
        %847 = vdwg.mxu0
        %848 = vmatpush.bf16.msra.mxu0 0
        %849 = vmatpush.bf16.msra.mxu0 0
        %850 = vmatpush.bf16.msra.mxu0 0
        %851 = vmatpush.bf16.msra.mxu0 0
        %852 = vmatpush.bf16.msra.mxu0 0
        %853 = vmatpush.bf16.msra.mxu0 0
        %854 = vmatpush.bf16.msra.mxu0 0
        %855 = vmatpush.bf16.msra.mxu0 %v651
        %856 = vmatmul.bf16.gmra.mxu0 %v603
        %v857 = vpop.f32.mrf.mxu0
        %v858 = vadd.f32 %v599, %v857
        %v859 = vpop.f32.mrf.mxu0
        %860 = vdwg.mxu0
        %s861 = scalar_lea.vmem %s1, 8
        %v862 = vld [vmem:[%s861] sm:$0xf]
        %863 = vrot.lane.b32.xlu0 %v273, 126
        %v864 = vpop.permute.xlu0 %863
        %865 = vrot.lane.b32.xlu0 %v274, 126
        %v866 = vpop.permute.xlu0 %865
        %867 = vrot.lane.b32.xlu0 %v275, 126
        %v868 = vpop.permute.xlu0 %867
        %869 = vrot.lane.b32.xlu0 %v276, 126
        %v870 = vpop.permute.xlu0 %869
        %871 = vrot.lane.b32.xlu0 %v277, 126
        %v872 = vpop.permute.xlu0 %871
        %873 = vrot.lane.b32.xlu0 %v278, 126
        %v874 = vpop.permute.xlu0 %873
        %875 = vrot.lane.b32.xlu0 %v279, 126
        %v876 = vpop.permute.xlu0 %875
        %877 = vrot.lane.b32.xlu0 %v280, 126
        %v878 = vpop.permute.xlu0 %877
        %879 = vrot.lane.b32.xlu0 %v281, 126
        %v880 = vpop.permute.xlu0 %879
        %881 = vrot.lane.b32.xlu0 %v282, 126
        %v882 = vpop.permute.xlu0 %881
        %883 = vrot.lane.b32.xlu0 %v283, 126
        %v884 = vpop.permute.xlu0 %883
        %885 = vrot.lane.b32.xlu0 %v284, 126
        %v886 = vpop.permute.xlu0 %885
        %887 = vrot.lane.b32.xlu0 %v285, 126
        %v888 = vpop.permute.xlu0 %887
        %889 = vrot.lane.b32.xlu0 %v286, 126
        %v890 = vpop.permute.xlu0 %889
        %891 = vrot.lane.b32.xlu0 %v287, 126
        %v892 = vpop.permute.xlu0 %891
        %893 = vrot.lane.b32.xlu0 %v288, 126
        %v894 = vpop.permute.xlu0 %893
        %895 = vrot.lane.b32.xlu0 %v289, 126
        %v896 = vpop.permute.xlu0 %895
        %vm897 = vcmask 1031168
        %v898 = vsel %vm897, %v864, %v866
        %v899 = vsel %vm897, %v866, %v868
        %v900 = vsel %vm897, %v868, %v870
        %v901 = vsel %vm897, %v870, %v872
        %v902 = vsel %vm897, %v872, %v874
        %v903 = vsel %vm897, %v874, %v876
        %v904 = vsel %vm897, %v876, %v878
        %v905 = vsel %vm897, %v878, %v880
        %v906 = vsel %vm897, %v880, %v882
        %v907 = vsel %vm897, %v882, %v884
        %v908 = vsel %vm897, %v884, %v886
        %v909 = vsel %vm897, %v886, %v888
        %v910 = vsel %vm897, %v888, %v890
        %v911 = vsel %vm897, %v890, %v892
        %v912 = vsel %vm897, %v892, %v894
        %v913 = vsel %vm897, %v894, %v896
        %v915 = vsel %vm341, %v862, 0
        %v918 = vsel %vm345, %v898, 0
        %v921 = vsel %vm345, %v899, 0
        %v924 = vsel %vm345, %v900, 0
        %v927 = vsel %vm345, %v901, 0
        %v930 = vsel %vm345, %v902, 0
        %v933 = vsel %vm345, %v903, 0
        %v936 = vsel %vm345, %v904, 0
        %v939 = vsel %vm345, %v905, 0
        %v942 = vsel %vm345, %v906, 0
        %v945 = vsel %vm345, %v907, 0
        %v948 = vsel %vm345, %v908, 0
        %v951 = vsel %vm345, %v909, 0
        %v954 = vsel %vm345, %v910, 0
        %v957 = vsel %vm345, %v911, 0
        %v960 = vsel %vm345, %v912, 0
        %v963 = vsel %vm345, %v913, 0
        %965 = vmatpush.bf16.msra.mxu0 0
        %966 = vmatpush.bf16.msra.mxu0 0
        %967 = vmatpush.bf16.msra.mxu0 0
        %968 = vmatpush.bf16.msra.mxu0 0
        %969 = vmatpush.bf16.msra.mxu0 0
        %970 = vmatpush.bf16.msra.mxu0 0
        %971 = vmatpush.bf16.msra.mxu0 0
        %972 = vmatpush.bf16.msra.mxu0 %v918
        %973 = vmatmul.bf16.gmra.mxu0 %v915
        %v974 = vpop.f32.mrf.mxu0
        %v975 = vadd.f32 0.0, %v974
        %v976 = vpop.f32.mrf.mxu0
        %977 = vdwg.mxu0
        %978 = vmatpush.bf16.msra.mxu0 0
        %979 = vmatpush.bf16.msra.mxu0 0
        %980 = vmatpush.bf16.msra.mxu0 0
        %981 = vmatpush.bf16.msra.mxu0 0
        %982 = vmatpush.bf16.msra.mxu0 0
        %983 = vmatpush.bf16.msra.mxu0 0
        %984 = vmatpush.bf16.msra.mxu0 0
        %985 = vmatpush.bf16.msra.mxu0 %v921
        %986 = vmatmul.bf16.gmra.mxu0 %v915
        %v987 = vpop.f32.mrf.mxu0
        %v988 = vadd.f32 0.0, %v987
        %v989 = vpop.f32.mrf.mxu0
        %990 = vdwg.mxu0
        %991 = vmatpush.bf16.msra.mxu0 0
        %992 = vmatpush.bf16.msra.mxu0 0
        %993 = vmatpush.bf16.msra.mxu0 0
        %994 = vmatpush.bf16.msra.mxu0 0
        %995 = vmatpush.bf16.msra.mxu0 0
        %996 = vmatpush.bf16.msra.mxu0 0
        %997 = vmatpush.bf16.msra.mxu0 0
        %998 = vmatpush.bf16.msra.mxu0 %v924
        %999 = vmatmul.bf16.gmra.mxu0 %v915
        %v1000 = vpop.f32.mrf.mxu0
        %v1001 = vadd.f32 0.0, %v1000
        %v1002 = vpop.f32.mrf.mxu0
        %1003 = vdwg.mxu0
        %1004 = vmatpush.bf16.msra.mxu0 0
        %1005 = vmatpush.bf16.msra.mxu0 0
        %1006 = vmatpush.bf16.msra.mxu0 0
        %1007 = vmatpush.bf16.msra.mxu0 0
        %1008 = vmatpush.bf16.msra.mxu0 0
        %1009 = vmatpush.bf16.msra.mxu0 0
        %1010 = vmatpush.bf16.msra.mxu0 0
        %1011 = vmatpush.bf16.msra.mxu0 %v927
        %1012 = vmatmul.bf16.gmra.mxu0 %v915
        %v1013 = vpop.f32.mrf.mxu0
        %v1014 = vadd.f32 0.0, %v1013
        %v1015 = vpop.f32.mrf.mxu0
        %1016 = vdwg.mxu0
        %1017 = vmatpush.bf16.msra.mxu0 0
        %1018 = vmatpush.bf16.msra.mxu0 0
        %1019 = vmatpush.bf16.msra.mxu0 0
        %1020 = vmatpush.bf16.msra.mxu0 0
        %1021 = vmatpush.bf16.msra.mxu0 0
        %1022 = vmatpush.bf16.msra.mxu0 0
        %1023 = vmatpush.bf16.msra.mxu0 0
        %1024 = vmatpush.bf16.msra.mxu0 %v930
        %1025 = vmatmul.bf16.gmra.mxu0 %v915
        %v1026 = vpop.f32.mrf.mxu0
        %v1027 = vadd.f32 0.0, %v1026
        %v1028 = vpop.f32.mrf.mxu0
        %1029 = vdwg.mxu0
        %1030 = vmatpush.bf16.msra.mxu0 0
        %1031 = vmatpush.bf16.msra.mxu0 0
        %1032 = vmatpush.bf16.msra.mxu0 0
        %1033 = vmatpush.bf16.msra.mxu0 0
        %1034 = vmatpush.bf16.msra.mxu0 0
        %1035 = vmatpush.bf16.msra.mxu0 0
        %1036 = vmatpush.bf16.msra.mxu0 0
        %1037 = vmatpush.bf16.msra.mxu0 %v933
        %1038 = vmatmul.bf16.gmra.mxu0 %v915
        %v1039 = vpop.f32.mrf.mxu0
        %v1040 = vadd.f32 0.0, %v1039
        %v1041 = vpop.f32.mrf.mxu0
        %1042 = vdwg.mxu0
        %1043 = vmatpush.bf16.msra.mxu0 0
        %1044 = vmatpush.bf16.msra.mxu0 0
        %1045 = vmatpush.bf16.msra.mxu0 0
        %1046 = vmatpush.bf16.msra.mxu0 0
        %1047 = vmatpush.bf16.msra.mxu0 0
        %1048 = vmatpush.bf16.msra.mxu0 0
        %1049 = vmatpush.bf16.msra.mxu0 0
        %1050 = vmatpush.bf16.msra.mxu0 %v936
        %1051 = vmatmul.bf16.gmra.mxu0 %v915
        %v1052 = vpop.f32.mrf.mxu0
        %v1053 = vadd.f32 0.0, %v1052
        %v1054 = vpop.f32.mrf.mxu0
        %1055 = vdwg.mxu0
        %1056 = vmatpush.bf16.msra.mxu0 0
        %1057 = vmatpush.bf16.msra.mxu0 0
        %1058 = vmatpush.bf16.msra.mxu0 0
        %1059 = vmatpush.bf16.msra.mxu0 0
        %1060 = vmatpush.bf16.msra.mxu0 0
        %1061 = vmatpush.bf16.msra.mxu0 0
        %1062 = vmatpush.bf16.msra.mxu0 0
        %1063 = vmatpush.bf16.msra.mxu0 %v939
        %1064 = vmatmul.bf16.gmra.mxu0 %v915
        %v1065 = vpop.f32.mrf.mxu0
        %v1066 = vadd.f32 0.0, %v1065
        %v1067 = vpop.f32.mrf.mxu0
        %1068 = vdwg.mxu0
        %1069 = vmatpush.bf16.msra.mxu0 0
        %1070 = vmatpush.bf16.msra.mxu0 0
        %1071 = vmatpush.bf16.msra.mxu0 0
        %1072 = vmatpush.bf16.msra.mxu0 0
        %1073 = vmatpush.bf16.msra.mxu0 0
        %1074 = vmatpush.bf16.msra.mxu0 0
        %1075 = vmatpush.bf16.msra.mxu0 0
        %1076 = vmatpush.bf16.msra.mxu0 %v942
        %1077 = vmatmul.bf16.gmra.mxu0 %v915
        %v1078 = vpop.f32.mrf.mxu0
        %v1079 = vadd.f32 0.0, %v1078
        %v1080 = vpop.f32.mrf.mxu0
        %1081 = vdwg.mxu0
        %1082 = vmatpush.bf16.msra.mxu0 0
        %1083 = vmatpush.bf16.msra.mxu0 0
        %1084 = vmatpush.bf16.msra.mxu0 0
        %1085 = vmatpush.bf16.msra.mxu0 0
        %1086 = vmatpush.bf16.msra.mxu0 0
        %1087 = vmatpush.bf16.msra.mxu0 0
        %1088 = vmatpush.bf16.msra.mxu0 0
        %1089 = vmatpush.bf16.msra.mxu0 %v945
        %1090 = vmatmul.bf16.gmra.mxu0 %v915
        %v1091 = vpop.f32.mrf.mxu0
        %v1092 = vadd.f32 0.0, %v1091
        %v1093 = vpop.f32.mrf.mxu0
        %1094 = vdwg.mxu0
        %1095 = vmatpush.bf16.msra.mxu0 0
        %1096 = vmatpush.bf16.msra.mxu0 0
        %1097 = vmatpush.bf16.msra.mxu0 0
        %1098 = vmatpush.bf16.msra.mxu0 0
        %1099 = vmatpush.bf16.msra.mxu0 0
        %1100 = vmatpush.bf16.msra.mxu0 0
        %1101 = vmatpush.bf16.msra.mxu0 0
        %1102 = vmatpush.bf16.msra.mxu0 %v948
        %1103 = vmatmul.bf16.gmra.mxu0 %v915
        %v1104 = vpop.f32.mrf.mxu0
        %v1105 = vadd.f32 0.0, %v1104
        %v1106 = vpop.f32.mrf.mxu0
        %1107 = vdwg.mxu0
        %1108 = vmatpush.bf16.msra.mxu0 0
        %1109 = vmatpush.bf16.msra.mxu0 0
        %1110 = vmatpush.bf16.msra.mxu0 0
        %1111 = vmatpush.bf16.msra.mxu0 0
        %1112 = vmatpush.bf16.msra.mxu0 0
        %1113 = vmatpush.bf16.msra.mxu0 0
        %1114 = vmatpush.bf16.msra.mxu0 0
        %1115 = vmatpush.bf16.msra.mxu0 %v951
        %1116 = vmatmul.bf16.gmra.mxu0 %v915
        %v1117 = vpop.f32.mrf.mxu0
        %v1118 = vadd.f32 0.0, %v1117
        %v1119 = vpop.f32.mrf.mxu0
        %1120 = vdwg.mxu0
        %1121 = vmatpush.bf16.msra.mxu0 0
        %1122 = vmatpush.bf16.msra.mxu0 0
        %1123 = vmatpush.bf16.msra.mxu0 0
        %1124 = vmatpush.bf16.msra.mxu0 0
        %1125 = vmatpush.bf16.msra.mxu0 0
        %1126 = vmatpush.bf16.msra.mxu0 0
        %1127 = vmatpush.bf16.msra.mxu0 0
        %1128 = vmatpush.bf16.msra.mxu0 %v954
        %1129 = vmatmul.bf16.gmra.mxu0 %v915
        %v1130 = vpop.f32.mrf.mxu0
        %v1131 = vadd.f32 0.0, %v1130
        %v1132 = vpop.f32.mrf.mxu0
        %1133 = vdwg.mxu0
        %1134 = vmatpush.bf16.msra.mxu0 0
        %1135 = vmatpush.bf16.msra.mxu0 0
        %1136 = vmatpush.bf16.msra.mxu0 0
        %1137 = vmatpush.bf16.msra.mxu0 0
        %1138 = vmatpush.bf16.msra.mxu0 0
        %1139 = vmatpush.bf16.msra.mxu0 0
        %1140 = vmatpush.bf16.msra.mxu0 0
        %1141 = vmatpush.bf16.msra.mxu0 %v957
        %1142 = vmatmul.bf16.gmra.mxu0 %v915
        %v1143 = vpop.f32.mrf.mxu0
        %v1144 = vadd.f32 0.0, %v1143
        %v1145 = vpop.f32.mrf.mxu0
        %1146 = vdwg.mxu0
        %1147 = vmatpush.bf16.msra.mxu0 0
        %1148 = vmatpush.bf16.msra.mxu0 0
        %1149 = vmatpush.bf16.msra.mxu0 0
        %1150 = vmatpush.bf16.msra.mxu0 0
        %1151 = vmatpush.bf16.msra.mxu0 0
        %1152 = vmatpush.bf16.msra.mxu0 0
        %1153 = vmatpush.bf16.msra.mxu0 0
        %1154 = vmatpush.bf16.msra.mxu0 %v960
        %1155 = vmatmul.bf16.gmra.mxu0 %v915
        %v1156 = vpop.f32.mrf.mxu0
        %v1157 = vadd.f32 0.0, %v1156
        %v1158 = vpop.f32.mrf.mxu0
        %1159 = vdwg.mxu0
        %1160 = vmatpush.bf16.msra.mxu0 0
        %1161 = vmatpush.bf16.msra.mxu0 0
        %1162 = vmatpush.bf16.msra.mxu0 0
        %1163 = vmatpush.bf16.msra.mxu0 0
        %1164 = vmatpush.bf16.msra.mxu0 0
        %1165 = vmatpush.bf16.msra.mxu0 0
        %1166 = vmatpush.bf16.msra.mxu0 0
        %1167 = vmatpush.bf16.msra.mxu0 %v963
        %1168 = vmatmul.bf16.gmra.mxu0 %v915
        %v1169 = vpop.f32.mrf.mxu0
        %v1170 = vadd.f32 0.0, %v1169
        %v1171 = vpop.f32.mrf.mxu0
        %1172 = vdwg.mxu0
        %v1173 = vadd.f32 %v663, %v975
        %v1174 = vadd.f32 %v676, %v988
        %v1175 = vadd.f32 %v689, %v1001
        %v1176 = vadd.f32 %v702, %v1014
        %v1177 = vadd.f32 %v715, %v1027
        %v1178 = vadd.f32 %v728, %v1040
        %v1179 = vadd.f32 %v741, %v1053
        %v1180 = vadd.f32 %v754, %v1066
        %v1181 = vadd.f32 %v767, %v1079
        %v1182 = vadd.f32 %v780, %v1092
        %v1183 = vadd.f32 %v793, %v1105
        %v1184 = vadd.f32 %v806, %v1118
        %v1185 = vadd.f32 %v819, %v1131
        %v1186 = vadd.f32 %v832, %v1144
        %v1187 = vadd.f32 %v845, %v1157
        %v1188 = vadd.f32 %v858, %v1170
        %s1189 = scalar_lea.vmem %s1, 12
        %v1190 = vld [vmem:[%s1189] sm:$0xf]
        %v1192 = vsel %vm341, %v1190, 0
        %v1195 = vsel %vm345, %v289, 0
        %1197 = vmatpush.bf16.msra.mxu0 0
        %1198 = vmatpush.bf16.msra.mxu0 0
        %1199 = vmatpush.bf16.msra.mxu0 0
        %1200 = vmatpush.bf16.msra.mxu0 0
        %1201 = vmatpush.bf16.msra.mxu0 0
        %1202 = vmatpush.bf16.msra.mxu0 0
        %1203 = vmatpush.bf16.msra.mxu0 0
        %1204 = vmatpush.bf16.msra.mxu0 %v609
        %1205 = vmatmul.bf16.gmra.mxu0 %v1192
        %v1206 = vpop.f32.mrf.mxu0
        %v1207 = vadd.f32 0.0, %v1206
        %v1208 = vpop.f32.mrf.mxu0
        %1209 = vdwg.mxu0
        %1210 = vmatpush.bf16.msra.mxu0 0
        %1211 = vmatpush.bf16.msra.mxu0 0
        %1212 = vmatpush.bf16.msra.mxu0 0
        %1213 = vmatpush.bf16.msra.mxu0 0
        %1214 = vmatpush.bf16.msra.mxu0 0
        %1215 = vmatpush.bf16.msra.mxu0 0
        %1216 = vmatpush.bf16.msra.mxu0 0
        %1217 = vmatpush.bf16.msra.mxu0 %v612
        %1218 = vmatmul.bf16.gmra.mxu0 %v1192
        %v1219 = vpop.f32.mrf.mxu0
        %v1220 = vadd.f32 0.0, %v1219
        %v1221 = vpop.f32.mrf.mxu0
        %1222 = vdwg.mxu0
        %1223 = vmatpush.bf16.msra.mxu0 0
        %1224 = vmatpush.bf16.msra.mxu0 0
        %1225 = vmatpush.bf16.msra.mxu0 0
        %1226 = vmatpush.bf16.msra.mxu0 0
        %1227 = vmatpush.bf16.msra.mxu0 0
        %1228 = vmatpush.bf16.msra.mxu0 0
        %1229 = vmatpush.bf16.msra.mxu0 0
        %1230 = vmatpush.bf16.msra.mxu0 %v615
        %1231 = vmatmul.bf16.gmra.mxu0 %v1192
        %v1232 = vpop.f32.mrf.mxu0
        %v1233 = vadd.f32 0.0, %v1232
        %v1234 = vpop.f32.mrf.mxu0
        %1235 = vdwg.mxu0
        %1236 = vmatpush.bf16.msra.mxu0 0
        %1237 = vmatpush.bf16.msra.mxu0 0
        %1238 = vmatpush.bf16.msra.mxu0 0
        %1239 = vmatpush.bf16.msra.mxu0 0
        %1240 = vmatpush.bf16.msra.mxu0 0
        %1241 = vmatpush.bf16.msra.mxu0 0
        %1242 = vmatpush.bf16.msra.mxu0 0
        %1243 = vmatpush.bf16.msra.mxu0 %v618
        %1244 = vmatmul.bf16.gmra.mxu0 %v1192
        %v1245 = vpop.f32.mrf.mxu0
        %v1246 = vadd.f32 0.0, %v1245
        %v1247 = vpop.f32.mrf.mxu0
        %1248 = vdwg.mxu0
        %1249 = vmatpush.bf16.msra.mxu0 0
        %1250 = vmatpush.bf16.msra.mxu0 0
        %1251 = vmatpush.bf16.msra.mxu0 0
        %1252 = vmatpush.bf16.msra.mxu0 0
        %1253 = vmatpush.bf16.msra.mxu0 0
        %1254 = vmatpush.bf16.msra.mxu0 0
        %1255 = vmatpush.bf16.msra.mxu0 0
        %1256 = vmatpush.bf16.msra.mxu0 %v621
        %1257 = vmatmul.bf16.gmra.mxu0 %v1192
        %v1258 = vpop.f32.mrf.mxu0
        %v1259 = vadd.f32 0.0, %v1258
        %v1260 = vpop.f32.mrf.mxu0
        %1261 = vdwg.mxu0
        %1262 = vmatpush.bf16.msra.mxu0 0
        %1263 = vmatpush.bf16.msra.mxu0 0
        %1264 = vmatpush.bf16.msra.mxu0 0
        %1265 = vmatpush.bf16.msra.mxu0 0
        %1266 = vmatpush.bf16.msra.mxu0 0
        %1267 = vmatpush.bf16.msra.mxu0 0
        %1268 = vmatpush.bf16.msra.mxu0 0
        %1269 = vmatpush.bf16.msra.mxu0 %v624
        %1270 = vmatmul.bf16.gmra.mxu0 %v1192
        %v1271 = vpop.f32.mrf.mxu0
        %v1272 = vadd.f32 0.0, %v1271
        %v1273 = vpop.f32.mrf.mxu0
        %1274 = vdwg.mxu0
        %1275 = vmatpush.bf16.msra.mxu0 0
        %1276 = vmatpush.bf16.msra.mxu0 0
        %1277 = vmatpush.bf16.msra.mxu0 0
        %1278 = vmatpush.bf16.msra.mxu0 0
        %1279 = vmatpush.bf16.msra.mxu0 0
        %1280 = vmatpush.bf16.msra.mxu0 0
        %1281 = vmatpush.bf16.msra.mxu0 0
        %1282 = vmatpush.bf16.msra.mxu0 %v627
        %1283 = vmatmul.bf16.gmra.mxu0 %v1192
        %v1284 = vpop.f32.mrf.mxu0
        %v1285 = vadd.f32 0.0, %v1284
        %v1286 = vpop.f32.mrf.mxu0
        %1287 = vdwg.mxu0
        %1288 = vmatpush.bf16.msra.mxu0 0
        %1289 = vmatpush.bf16.msra.mxu0 0
        %1290 = vmatpush.bf16.msra.mxu0 0
        %1291 = vmatpush.bf16.msra.mxu0 0
        %1292 = vmatpush.bf16.msra.mxu0 0
        %1293 = vmatpush.bf16.msra.mxu0 0
        %1294 = vmatpush.bf16.msra.mxu0 0
        %1295 = vmatpush.bf16.msra.mxu0 %v630
        %1296 = vmatmul.bf16.gmra.mxu0 %v1192
        %v1297 = vpop.f32.mrf.mxu0
        %v1298 = vadd.f32 0.0, %v1297
        %v1299 = vpop.f32.mrf.mxu0
        %1300 = vdwg.mxu0
        %1301 = vmatpush.bf16.msra.mxu0 0
        %1302 = vmatpush.bf16.msra.mxu0 0
        %1303 = vmatpush.bf16.msra.mxu0 0
        %1304 = vmatpush.bf16.msra.mxu0 0
        %1305 = vmatpush.bf16.msra.mxu0 0
        %1306 = vmatpush.bf16.msra.mxu0 0
        %1307 = vmatpush.bf16.msra.mxu0 0
        %1308 = vmatpush.bf16.msra.mxu0 %v633
        %1309 = vmatmul.bf16.gmra.mxu0 %v1192
        %v1310 = vpop.f32.mrf.mxu0
        %v1311 = vadd.f32 0.0, %v1310
        %v1312 = vpop.f32.mrf.mxu0
        %1313 = vdwg.mxu0
        %1314 = vmatpush.bf16.msra.mxu0 0
        %1315 = vmatpush.bf16.msra.mxu0 0
        %1316 = vmatpush.bf16.msra.mxu0 0
        %1317 = vmatpush.bf16.msra.mxu0 0
        %1318 = vmatpush.bf16.msra.mxu0 0
        %1319 = vmatpush.bf16.msra.mxu0 0
        %1320 = vmatpush.bf16.msra.mxu0 0
        %1321 = vmatpush.bf16.msra.mxu0 %v636
        %1322 = vmatmul.bf16.gmra.mxu0 %v1192
        %v1323 = vpop.f32.mrf.mxu0
        %v1324 = vadd.f32 0.0, %v1323
        %v1325 = vpop.f32.mrf.mxu0
        %1326 = vdwg.mxu0
        %1327 = vmatpush.bf16.msra.mxu0 0
        %1328 = vmatpush.bf16.msra.mxu0 0
        %1329 = vmatpush.bf16.msra.mxu0 0
        %1330 = vmatpush.bf16.msra.mxu0 0
        %1331 = vmatpush.bf16.msra.mxu0 0
        %1332 = vmatpush.bf16.msra.mxu0 0
        %1333 = vmatpush.bf16.msra.mxu0 0
        %1334 = vmatpush.bf16.msra.mxu0 %v639
        %1335 = vmatmul.bf16.gmra.mxu0 %v1192
        %v1336 = vpop.f32.mrf.mxu0
        %v1337 = vadd.f32 0.0, %v1336
        %v1338 = vpop.f32.mrf.mxu0
        %1339 = vdwg.mxu0
        %1340 = vmatpush.bf16.msra.mxu0 0
        %1341 = vmatpush.bf16.msra.mxu0 0
        %1342 = vmatpush.bf16.msra.mxu0 0
        %1343 = vmatpush.bf16.msra.mxu0 0
        %1344 = vmatpush.bf16.msra.mxu0 0
        %1345 = vmatpush.bf16.msra.mxu0 0
        %1346 = vmatpush.bf16.msra.mxu0 0
        %1347 = vmatpush.bf16.msra.mxu0 %v642
        %1348 = vmatmul.bf16.gmra.mxu0 %v1192
        %v1349 = vpop.f32.mrf.mxu0
        %v1350 = vadd.f32 0.0, %v1349
        %v1351 = vpop.f32.mrf.mxu0
        %1352 = vdwg.mxu0
        %1353 = vmatpush.bf16.msra.mxu0 0
        %1354 = vmatpush.bf16.msra.mxu0 0
        %1355 = vmatpush.bf16.msra.mxu0 0
        %1356 = vmatpush.bf16.msra.mxu0 0
        %1357 = vmatpush.bf16.msra.mxu0 0
        %1358 = vmatpush.bf16.msra.mxu0 0
        %1359 = vmatpush.bf16.msra.mxu0 0
        %1360 = vmatpush.bf16.msra.mxu0 %v645
        %1361 = vmatmul.bf16.gmra.mxu0 %v1192
        %v1362 = vpop.f32.mrf.mxu0
        %v1363 = vadd.f32 0.0, %v1362
        %v1364 = vpop.f32.mrf.mxu0
        %1365 = vdwg.mxu0
        %1366 = vmatpush.bf16.msra.mxu0 0
        %1367 = vmatpush.bf16.msra.mxu0 0
        %1368 = vmatpush.bf16.msra.mxu0 0
        %1369 = vmatpush.bf16.msra.mxu0 0
        %1370 = vmatpush.bf16.msra.mxu0 0
        %1371 = vmatpush.bf16.msra.mxu0 0
        %1372 = vmatpush.bf16.msra.mxu0 0
        %1373 = vmatpush.bf16.msra.mxu0 %v648
        %1374 = vmatmul.bf16.gmra.mxu0 %v1192
        %v1375 = vpop.f32.mrf.mxu0
        %v1376 = vadd.f32 0.0, %v1375
        %v1377 = vpop.f32.mrf.mxu0
        %1378 = vdwg.mxu0
        %1379 = vmatpush.bf16.msra.mxu0 0
        %1380 = vmatpush.bf16.msra.mxu0 0
        %1381 = vmatpush.bf16.msra.mxu0 0
        %1382 = vmatpush.bf16.msra.mxu0 0
        %1383 = vmatpush.bf16.msra.mxu0 0
        %1384 = vmatpush.bf16.msra.mxu0 0
        %1385 = vmatpush.bf16.msra.mxu0 0
        %1386 = vmatpush.bf16.msra.mxu0 %v651
        %1387 = vmatmul.bf16.gmra.mxu0 %v1192
        %v1388 = vpop.f32.mrf.mxu0
        %v1389 = vadd.f32 0.0, %v1388
        %v1390 = vpop.f32.mrf.mxu0
        %1391 = vdwg.mxu0
        %1392 = vmatpush.bf16.msra.mxu0 0
        %1393 = vmatpush.bf16.msra.mxu0 0
        %1394 = vmatpush.bf16.msra.mxu0 0
        %1395 = vmatpush.bf16.msra.mxu0 0
        %1396 = vmatpush.bf16.msra.mxu0 0
        %1397 = vmatpush.bf16.msra.mxu0 0
        %1398 = vmatpush.bf16.msra.mxu0 0
        %1399 = vmatpush.bf16.msra.mxu0 %v1195
        %1400 = vmatmul.bf16.gmra.mxu0 %v1192
        %v1401 = vpop.f32.mrf.mxu0
        %v1402 = vadd.f32 0.0, %v1401
        %v1403 = vpop.f32.mrf.mxu0
        %1404 = vdwg.mxu0
        %v1405 = vadd.f32 %v1173, %v1207
        %v1406 = vadd.f32 %v1174, %v1220
        %v1407 = vadd.f32 %v1175, %v1233
        %v1408 = vadd.f32 %v1176, %v1246
        %v1409 = vadd.f32 %v1177, %v1259
        %v1410 = vadd.f32 %v1178, %v1272
        %v1411 = vadd.f32 %v1179, %v1285
        %v1412 = vadd.f32 %v1180, %v1298
        %v1413 = vadd.f32 %v1181, %v1311
        %v1414 = vadd.f32 %v1182, %v1324
        %v1415 = vadd.f32 %v1183, %v1337
        %v1416 = vadd.f32 %v1184, %v1350
        %v1417 = vadd.f32 %v1185, %v1363
        %v1418 = vadd.f32 %v1186, %v1376
        %v1419 = vadd.f32 %v1187, %v1389
        %v1420 = vadd.f32 %v1188, %v1402
        %s1421 = scalar_lea.vmem %s1, 16
        %v1422 = vld [vmem:[%s1421] sm:$0xf]
        %v1423 = vunpack.c.h.b16 %v242
        %v1424 = vpack.c.b16 %v1423, %v1423
        %1425 = vrot.lane.b32.xlu0 %v1424, 127
        %v1426 = vpop.permute.xlu0 %1425
        %v1427 = vsel %vm324, %v323, %v1426
        %v1429 = vsel %vm341, %v1422, 0
        %v1432 = vsel %vm345, %v1427, 0
        %1434 = vmatpush.bf16.msra.mxu0 0
        %1435 = vmatpush.bf16.msra.mxu0 0
        %1436 = vmatpush.bf16.msra.mxu0 0
        %1437 = vmatpush.bf16.msra.mxu0 0
        %1438 = vmatpush.bf16.msra.mxu0 0
        %1439 = vmatpush.bf16.msra.mxu0 0
        %1440 = vmatpush.bf16.msra.mxu0 0
        %1441 = vmatpush.bf16.msra.mxu0 %v350
        %1442 = vmatmul.bf16.gmra.mxu0 %v1429
        %v1443 = vpop.f32.mrf.mxu0
        %v1444 = vadd.f32 0.0, %v1443
        %v1445 = vpop.f32.mrf.mxu0
        %1446 = vdwg.mxu0
        %1447 = vmatpush.bf16.msra.mxu0 0
        %1448 = vmatpush.bf16.msra.mxu0 0
        %1449 = vmatpush.bf16.msra.mxu0 0
        %1450 = vmatpush.bf16.msra.mxu0 0
        %1451 = vmatpush.bf16.msra.mxu0 0
        %1452 = vmatpush.bf16.msra.mxu0 0
        %1453 = vmatpush.bf16.msra.mxu0 0
        %1454 = vmatpush.bf16.msra.mxu0 %v353
        %1455 = vmatmul.bf16.gmra.mxu0 %v1429
        %v1456 = vpop.f32.mrf.mxu0
        %v1457 = vadd.f32 0.0, %v1456
        %v1458 = vpop.f32.mrf.mxu0
        %1459 = vdwg.mxu0
        %1460 = vmatpush.bf16.msra.mxu0 0
        %1461 = vmatpush.bf16.msra.mxu0 0
        %1462 = vmatpush.bf16.msra.mxu0 0
        %1463 = vmatpush.bf16.msra.mxu0 0
        %1464 = vmatpush.bf16.msra.mxu0 0
        %1465 = vmatpush.bf16.msra.mxu0 0
        %1466 = vmatpush.bf16.msra.mxu0 0
        %1467 = vmatpush.bf16.msra.mxu0 %v356
        %1468 = vmatmul.bf16.gmra.mxu0 %v1429
        %v1469 = vpop.f32.mrf.mxu0
        %v1470 = vadd.f32 0.0, %v1469
        %v1471 = vpop.f32.mrf.mxu0
        %1472 = vdwg.mxu0
        %1473 = vmatpush.bf16.msra.mxu0 0
        %1474 = vmatpush.bf16.msra.mxu0 0
        %1475 = vmatpush.bf16.msra.mxu0 0
        %1476 = vmatpush.bf16.msra.mxu0 0
        %1477 = vmatpush.bf16.msra.mxu0 0
        %1478 = vmatpush.bf16.msra.mxu0 0
        %1479 = vmatpush.bf16.msra.mxu0 0
        %1480 = vmatpush.bf16.msra.mxu0 %v359
        %1481 = vmatmul.bf16.gmra.mxu0 %v1429
        %v1482 = vpop.f32.mrf.mxu0
        %v1483 = vadd.f32 0.0, %v1482
        %v1484 = vpop.f32.mrf.mxu0
        %1485 = vdwg.mxu0
        %1486 = vmatpush.bf16.msra.mxu0 0
        %1487 = vmatpush.bf16.msra.mxu0 0
        %1488 = vmatpush.bf16.msra.mxu0 0
        %1489 = vmatpush.bf16.msra.mxu0 0
        %1490 = vmatpush.bf16.msra.mxu0 0
        %1491 = vmatpush.bf16.msra.mxu0 0
        %1492 = vmatpush.bf16.msra.mxu0 0
        %1493 = vmatpush.bf16.msra.mxu0 %v362
        %1494 = vmatmul.bf16.gmra.mxu0 %v1429
        %v1495 = vpop.f32.mrf.mxu0
        %v1496 = vadd.f32 0.0, %v1495
        %v1497 = vpop.f32.mrf.mxu0
        %1498 = vdwg.mxu0
        %1499 = vmatpush.bf16.msra.mxu0 0
        %1500 = vmatpush.bf16.msra.mxu0 0
        %1501 = vmatpush.bf16.msra.mxu0 0
        %1502 = vmatpush.bf16.msra.mxu0 0
        %1503 = vmatpush.bf16.msra.mxu0 0
        %1504 = vmatpush.bf16.msra.mxu0 0
        %1505 = vmatpush.bf16.msra.mxu0 0
        %1506 = vmatpush.bf16.msra.mxu0 %v365
        %1507 = vmatmul.bf16.gmra.mxu0 %v1429
        %v1508 = vpop.f32.mrf.mxu0
        %v1509 = vadd.f32 0.0, %v1508
        %v1510 = vpop.f32.mrf.mxu0
        %1511 = vdwg.mxu0
        %1512 = vmatpush.bf16.msra.mxu0 0
        %1513 = vmatpush.bf16.msra.mxu0 0
        %1514 = vmatpush.bf16.msra.mxu0 0
        %1515 = vmatpush.bf16.msra.mxu0 0
        %1516 = vmatpush.bf16.msra.mxu0 0
        %1517 = vmatpush.bf16.msra.mxu0 0
        %1518 = vmatpush.bf16.msra.mxu0 0
        %1519 = vmatpush.bf16.msra.mxu0 %v368
        %1520 = vmatmul.bf16.gmra.mxu0 %v1429
        %v1521 = vpop.f32.mrf.mxu0
        %v1522 = vadd.f32 0.0, %v1521
        %v1523 = vpop.f32.mrf.mxu0
        %1524 = vdwg.mxu0
        %1525 = vmatpush.bf16.msra.mxu0 0
        %1526 = vmatpush.bf16.msra.mxu0 0
        %1527 = vmatpush.bf16.msra.mxu0 0
        %1528 = vmatpush.bf16.msra.mxu0 0
        %1529 = vmatpush.bf16.msra.mxu0 0
        %1530 = vmatpush.bf16.msra.mxu0 0
        %1531 = vmatpush.bf16.msra.mxu0 0
        %1532 = vmatpush.bf16.msra.mxu0 %v371
        %1533 = vmatmul.bf16.gmra.mxu0 %v1429
        %v1534 = vpop.f32.mrf.mxu0
        %v1535 = vadd.f32 0.0, %v1534
        %v1536 = vpop.f32.mrf.mxu0
        %1537 = vdwg.mxu0
        %1538 = vmatpush.bf16.msra.mxu0 0
        %1539 = vmatpush.bf16.msra.mxu0 0
        %1540 = vmatpush.bf16.msra.mxu0 0
        %1541 = vmatpush.bf16.msra.mxu0 0
        %1542 = vmatpush.bf16.msra.mxu0 0
        %1543 = vmatpush.bf16.msra.mxu0 0
        %1544 = vmatpush.bf16.msra.mxu0 0
        %1545 = vmatpush.bf16.msra.mxu0 %v374
        %1546 = vmatmul.bf16.gmra.mxu0 %v1429
        %v1547 = vpop.f32.mrf.mxu0
        %v1548 = vadd.f32 0.0, %v1547
        %v1549 = vpop.f32.mrf.mxu0
        %1550 = vdwg.mxu0
        %1551 = vmatpush.bf16.msra.mxu0 0
        %1552 = vmatpush.bf16.msra.mxu0 0
        %1553 = vmatpush.bf16.msra.mxu0 0
        %1554 = vmatpush.bf16.msra.mxu0 0
        %1555 = vmatpush.bf16.msra.mxu0 0
        %1556 = vmatpush.bf16.msra.mxu0 0
        %1557 = vmatpush.bf16.msra.mxu0 0
        %1558 = vmatpush.bf16.msra.mxu0 %v377
        %1559 = vmatmul.bf16.gmra.mxu0 %v1429
        %v1560 = vpop.f32.mrf.mxu0
        %v1561 = vadd.f32 0.0, %v1560
        %v1562 = vpop.f32.mrf.mxu0
        %1563 = vdwg.mxu0
        %1564 = vmatpush.bf16.msra.mxu0 0
        %1565 = vmatpush.bf16.msra.mxu0 0
        %1566 = vmatpush.bf16.msra.mxu0 0
        %1567 = vmatpush.bf16.msra.mxu0 0
        %1568 = vmatpush.bf16.msra.mxu0 0
        %1569 = vmatpush.bf16.msra.mxu0 0
        %1570 = vmatpush.bf16.msra.mxu0 0
        %1571 = vmatpush.bf16.msra.mxu0 %v380
        %1572 = vmatmul.bf16.gmra.mxu0 %v1429
        %v1573 = vpop.f32.mrf.mxu0
        %v1574 = vadd.f32 0.0, %v1573
        %v1575 = vpop.f32.mrf.mxu0
        %1576 = vdwg.mxu0
        %1577 = vmatpush.bf16.msra.mxu0 0
        %1578 = vmatpush.bf16.msra.mxu0 0
        %1579 = vmatpush.bf16.msra.mxu0 0
        %1580 = vmatpush.bf16.msra.mxu0 0
        %1581 = vmatpush.bf16.msra.mxu0 0
        %1582 = vmatpush.bf16.msra.mxu0 0
        %1583 = vmatpush.bf16.msra.mxu0 0
        %1584 = vmatpush.bf16.msra.mxu0 %v383
        %1585 = vmatmul.bf16.gmra.mxu0 %v1429
        %v1586 = vpop.f32.mrf.mxu0
        %v1587 = vadd.f32 0.0, %v1586
        %v1588 = vpop.f32.mrf.mxu0
        %1589 = vdwg.mxu0
        %1590 = vmatpush.bf16.msra.mxu0 0
        %1591 = vmatpush.bf16.msra.mxu0 0
        %1592 = vmatpush.bf16.msra.mxu0 0
        %1593 = vmatpush.bf16.msra.mxu0 0
        %1594 = vmatpush.bf16.msra.mxu0 0
        %1595 = vmatpush.bf16.msra.mxu0 0
        %1596 = vmatpush.bf16.msra.mxu0 0
        %1597 = vmatpush.bf16.msra.mxu0 %v386
        %1598 = vmatmul.bf16.gmra.mxu0 %v1429
        %v1599 = vpop.f32.mrf.mxu0
        %v1600 = vadd.f32 0.0, %v1599
        %v1601 = vpop.f32.mrf.mxu0
        %1602 = vdwg.mxu0
        %1603 = vmatpush.bf16.msra.mxu0 0
        %1604 = vmatpush.bf16.msra.mxu0 0
        %1605 = vmatpush.bf16.msra.mxu0 0
        %1606 = vmatpush.bf16.msra.mxu0 0
        %1607 = vmatpush.bf16.msra.mxu0 0
        %1608 = vmatpush.bf16.msra.mxu0 0
        %1609 = vmatpush.bf16.msra.mxu0 0
        %1610 = vmatpush.bf16.msra.mxu0 %v389
        %1611 = vmatmul.bf16.gmra.mxu0 %v1429
        %v1612 = vpop.f32.mrf.mxu0
        %v1613 = vadd.f32 0.0, %v1612
        %v1614 = vpop.f32.mrf.mxu0
        %1615 = vdwg.mxu0
        %1616 = vmatpush.bf16.msra.mxu0 0
        %1617 = vmatpush.bf16.msra.mxu0 0
        %1618 = vmatpush.bf16.msra.mxu0 0
        %1619 = vmatpush.bf16.msra.mxu0 0
        %1620 = vmatpush.bf16.msra.mxu0 0
        %1621 = vmatpush.bf16.msra.mxu0 0
        %1622 = vmatpush.bf16.msra.mxu0 0
        %1623 = vmatpush.bf16.msra.mxu0 %v392
        %1624 = vmatmul.bf16.gmra.mxu0 %v1429
        %v1625 = vpop.f32.mrf.mxu0
        %v1626 = vadd.f32 0.0, %v1625
        %v1627 = vpop.f32.mrf.mxu0
        %1628 = vdwg.mxu0
        %1629 = vmatpush.bf16.msra.mxu0 0
        %1630 = vmatpush.bf16.msra.mxu0 0
        %1631 = vmatpush.bf16.msra.mxu0 0
        %1632 = vmatpush.bf16.msra.mxu0 0
        %1633 = vmatpush.bf16.msra.mxu0 0
        %1634 = vmatpush.bf16.msra.mxu0 0
        %1635 = vmatpush.bf16.msra.mxu0 0
        %1636 = vmatpush.bf16.msra.mxu0 %v1432
        %1637 = vmatmul.bf16.gmra.mxu0 %v1429
        %v1638 = vpop.f32.mrf.mxu0
        %v1639 = vadd.f32 0.0, %v1638
        %v1640 = vpop.f32.mrf.mxu0
        %1641 = vdwg.mxu0
        %v1642 = vadd.f32 %v1405, %v1444
        %v1643 = vadd.f32 %v1406, %v1457
        %v1644 = vadd.f32 %v1407, %v1470
        %v1645 = vadd.f32 %v1408, %v1483
        %v1646 = vadd.f32 %v1409, %v1496
        %v1647 = vadd.f32 %v1410, %v1509
        %v1648 = vadd.f32 %v1411, %v1522
        %v1649 = vadd.f32 %v1412, %v1535
        %v1650 = vadd.f32 %v1413, %v1548
        %v1651 = vadd.f32 %v1414, %v1561
        %v1652 = vadd.f32 %v1415, %v1574
        %v1653 = vadd.f32 %v1416, %v1587
        %v1654 = vadd.f32 %v1417, %v1600
        %v1655 = vadd.f32 %v1418, %v1613
        %v1656 = vadd.f32 %v1419, %v1626
        %v1657 = vadd.f32 %v1420, %v1639
        %s1658 = scalar_lea.vmem %s1, 20
        %v1659 = vld [vmem:[%s1658] sm:$0xf]
        %1660 = vrot.lane.b32.xlu0 %v1424, 126
        %v1661 = vpop.permute.xlu0 %1660
        %v1662 = vsel %vm897, %v896, %v1661
        %v1664 = vsel %vm341, %v1659, 0
        %v1667 = vsel %vm345, %v1662, 0
        %1669 = vmatpush.bf16.msra.mxu0 0
        %1670 = vmatpush.bf16.msra.mxu0 0
        %1671 = vmatpush.bf16.msra.mxu0 0
        %1672 = vmatpush.bf16.msra.mxu0 0
        %1673 = vmatpush.bf16.msra.mxu0 0
        %1674 = vmatpush.bf16.msra.mxu0 0
        %1675 = vmatpush.bf16.msra.mxu0 0
        %1676 = vmatpush.bf16.msra.mxu0 %v921
        %1677 = vmatmul.bf16.gmra.mxu0 %v1664
        %v1678 = vpop.f32.mrf.mxu0
        %v1679 = vadd.f32 0.0, %v1678
        %v1680 = vpop.f32.mrf.mxu0
        %1681 = vdwg.mxu0
        %1682 = vmatpush.bf16.msra.mxu0 0
        %1683 = vmatpush.bf16.msra.mxu0 0
        %1684 = vmatpush.bf16.msra.mxu0 0
        %1685 = vmatpush.bf16.msra.mxu0 0
        %1686 = vmatpush.bf16.msra.mxu0 0
        %1687 = vmatpush.bf16.msra.mxu0 0
        %1688 = vmatpush.bf16.msra.mxu0 0
        %1689 = vmatpush.bf16.msra.mxu0 %v924
        %1690 = vmatmul.bf16.gmra.mxu0 %v1664
        %v1691 = vpop.f32.mrf.mxu0
        %v1692 = vadd.f32 0.0, %v1691
        %v1693 = vpop.f32.mrf.mxu0
        %1694 = vdwg.mxu0
        %1695 = vmatpush.bf16.msra.mxu0 0
        %1696 = vmatpush.bf16.msra.mxu0 0
        %1697 = vmatpush.bf16.msra.mxu0 0
        %1698 = vmatpush.bf16.msra.mxu0 0
        %1699 = vmatpush.bf16.msra.mxu0 0
        %1700 = vmatpush.bf16.msra.mxu0 0
        %1701 = vmatpush.bf16.msra.mxu0 0
        %1702 = vmatpush.bf16.msra.mxu0 %v927
        %1703 = vmatmul.bf16.gmra.mxu0 %v1664
        %v1704 = vpop.f32.mrf.mxu0
        %v1705 = vadd.f32 0.0, %v1704
        %v1706 = vpop.f32.mrf.mxu0
        %1707 = vdwg.mxu0
        %1708 = vmatpush.bf16.msra.mxu0 0
        %1709 = vmatpush.bf16.msra.mxu0 0
        %1710 = vmatpush.bf16.msra.mxu0 0
        %1711 = vmatpush.bf16.msra.mxu0 0
        %1712 = vmatpush.bf16.msra.mxu0 0
        %1713 = vmatpush.bf16.msra.mxu0 0
        %1714 = vmatpush.bf16.msra.mxu0 0
        %1715 = vmatpush.bf16.msra.mxu0 %v930
        %1716 = vmatmul.bf16.gmra.mxu0 %v1664
        %v1717 = vpop.f32.mrf.mxu0
        %v1718 = vadd.f32 0.0, %v1717
        %v1719 = vpop.f32.mrf.mxu0
        %1720 = vdwg.mxu0
        %1721 = vmatpush.bf16.msra.mxu0 0
        %1722 = vmatpush.bf16.msra.mxu0 0
        %1723 = vmatpush.bf16.msra.mxu0 0
        %1724 = vmatpush.bf16.msra.mxu0 0
        %1725 = vmatpush.bf16.msra.mxu0 0
        %1726 = vmatpush.bf16.msra.mxu0 0
        %1727 = vmatpush.bf16.msra.mxu0 0
        %1728 = vmatpush.bf16.msra.mxu0 %v933
        %1729 = vmatmul.bf16.gmra.mxu0 %v1664
        %v1730 = vpop.f32.mrf.mxu0
        %v1731 = vadd.f32 0.0, %v1730
        %v1732 = vpop.f32.mrf.mxu0
        %1733 = vdwg.mxu0
        %1734 = vmatpush.bf16.msra.mxu0 0
        %1735 = vmatpush.bf16.msra.mxu0 0
        %1736 = vmatpush.bf16.msra.mxu0 0
        %1737 = vmatpush.bf16.msra.mxu0 0
        %1738 = vmatpush.bf16.msra.mxu0 0
        %1739 = vmatpush.bf16.msra.mxu0 0
        %1740 = vmatpush.bf16.msra.mxu0 0
        %1741 = vmatpush.bf16.msra.mxu0 %v936
        %1742 = vmatmul.bf16.gmra.mxu0 %v1664
        %v1743 = vpop.f32.mrf.mxu0
        %v1744 = vadd.f32 0.0, %v1743
        %v1745 = vpop.f32.mrf.mxu0
        %1746 = vdwg.mxu0
        %1747 = vmatpush.bf16.msra.mxu0 0
        %1748 = vmatpush.bf16.msra.mxu0 0
        %1749 = vmatpush.bf16.msra.mxu0 0
        %1750 = vmatpush.bf16.msra.mxu0 0
        %1751 = vmatpush.bf16.msra.mxu0 0
        %1752 = vmatpush.bf16.msra.mxu0 0
        %1753 = vmatpush.bf16.msra.mxu0 0
        %1754 = vmatpush.bf16.msra.mxu0 %v939
        %1755 = vmatmul.bf16.gmra.mxu0 %v1664
        %v1756 = vpop.f32.mrf.mxu0
        %v1757 = vadd.f32 0.0, %v1756
        %v1758 = vpop.f32.mrf.mxu0
        %1759 = vdwg.mxu0
        %1760 = vmatpush.bf16.msra.mxu0 0
        %1761 = vmatpush.bf16.msra.mxu0 0
        %1762 = vmatpush.bf16.msra.mxu0 0
        %1763 = vmatpush.bf16.msra.mxu0 0
        %1764 = vmatpush.bf16.msra.mxu0 0
        %1765 = vmatpush.bf16.msra.mxu0 0
        %1766 = vmatpush.bf16.msra.mxu0 0
        %1767 = vmatpush.bf16.msra.mxu0 %v942
        %1768 = vmatmul.bf16.gmra.mxu0 %v1664
        %v1769 = vpop.f32.mrf.mxu0
        %v1770 = vadd.f32 0.0, %v1769
        %v1771 = vpop.f32.mrf.mxu0
        %1772 = vdwg.mxu0
        %1773 = vmatpush.bf16.msra.mxu0 0
        %1774 = vmatpush.bf16.msra.mxu0 0
        %1775 = vmatpush.bf16.msra.mxu0 0
        %1776 = vmatpush.bf16.msra.mxu0 0
        %1777 = vmatpush.bf16.msra.mxu0 0
        %1778 = vmatpush.bf16.msra.mxu0 0
        %1779 = vmatpush.bf16.msra.mxu0 0
        %1780 = vmatpush.bf16.msra.mxu0 %v945
        %1781 = vmatmul.bf16.gmra.mxu0 %v1664
        %v1782 = vpop.f32.mrf.mxu0
        %v1783 = vadd.f32 0.0, %v1782
        %v1784 = vpop.f32.mrf.mxu0
        %1785 = vdwg.mxu0
        %1786 = vmatpush.bf16.msra.mxu0 0
        %1787 = vmatpush.bf16.msra.mxu0 0
        %1788 = vmatpush.bf16.msra.mxu0 0
        %1789 = vmatpush.bf16.msra.mxu0 0
        %1790 = vmatpush.bf16.msra.mxu0 0
        %1791 = vmatpush.bf16.msra.mxu0 0
        %1792 = vmatpush.bf16.msra.mxu0 0
        %1793 = vmatpush.bf16.msra.mxu0 %v948
        %1794 = vmatmul.bf16.gmra.mxu0 %v1664
        %v1795 = vpop.f32.mrf.mxu0
        %v1796 = vadd.f32 0.0, %v1795
        %v1797 = vpop.f32.mrf.mxu0
        %1798 = vdwg.mxu0
        %1799 = vmatpush.bf16.msra.mxu0 0
        %1800 = vmatpush.bf16.msra.mxu0 0
        %1801 = vmatpush.bf16.msra.mxu0 0
        %1802 = vmatpush.bf16.msra.mxu0 0
        %1803 = vmatpush.bf16.msra.mxu0 0
        %1804 = vmatpush.bf16.msra.mxu0 0
        %1805 = vmatpush.bf16.msra.mxu0 0
        %1806 = vmatpush.bf16.msra.mxu0 %v951
        %1807 = vmatmul.bf16.gmra.mxu0 %v1664
        %v1808 = vpop.f32.mrf.mxu0
        %v1809 = vadd.f32 0.0, %v1808
        %v1810 = vpop.f32.mrf.mxu0
        %1811 = vdwg.mxu0
        %1812 = vmatpush.bf16.msra.mxu0 0
        %1813 = vmatpush.bf16.msra.mxu0 0
        %1814 = vmatpush.bf16.msra.mxu0 0
        %1815 = vmatpush.bf16.msra.mxu0 0
        %1816 = vmatpush.bf16.msra.mxu0 0
        %1817 = vmatpush.bf16.msra.mxu0 0
        %1818 = vmatpush.bf16.msra.mxu0 0
        %1819 = vmatpush.bf16.msra.mxu0 %v954
        %1820 = vmatmul.bf16.gmra.mxu0 %v1664
        %v1821 = vpop.f32.mrf.mxu0
        %v1822 = vadd.f32 0.0, %v1821
        %v1823 = vpop.f32.mrf.mxu0
        %1824 = vdwg.mxu0
        %1825 = vmatpush.bf16.msra.mxu0 0
        %1826 = vmatpush.bf16.msra.mxu0 0
        %1827 = vmatpush.bf16.msra.mxu0 0
        %1828 = vmatpush.bf16.msra.mxu0 0
        %1829 = vmatpush.bf16.msra.mxu0 0
        %1830 = vmatpush.bf16.msra.mxu0 0
        %1831 = vmatpush.bf16.msra.mxu0 0
        %1832 = vmatpush.bf16.msra.mxu0 %v957
        %1833 = vmatmul.bf16.gmra.mxu0 %v1664
        %v1834 = vpop.f32.mrf.mxu0
        %v1835 = vadd.f32 0.0, %v1834
        %v1836 = vpop.f32.mrf.mxu0
        %1837 = vdwg.mxu0
        %1838 = vmatpush.bf16.msra.mxu0 0
        %1839 = vmatpush.bf16.msra.mxu0 0
        %1840 = vmatpush.bf16.msra.mxu0 0
        %1841 = vmatpush.bf16.msra.mxu0 0
        %1842 = vmatpush.bf16.msra.mxu0 0
        %1843 = vmatpush.bf16.msra.mxu0 0
        %1844 = vmatpush.bf16.msra.mxu0 0
        %1845 = vmatpush.bf16.msra.mxu0 %v960
        %1846 = vmatmul.bf16.gmra.mxu0 %v1664
        %v1847 = vpop.f32.mrf.mxu0
        %v1848 = vadd.f32 0.0, %v1847
        %v1849 = vpop.f32.mrf.mxu0
        %1850 = vdwg.mxu0
        %1851 = vmatpush.bf16.msra.mxu0 0
        %1852 = vmatpush.bf16.msra.mxu0 0
        %1853 = vmatpush.bf16.msra.mxu0 0
        %1854 = vmatpush.bf16.msra.mxu0 0
        %1855 = vmatpush.bf16.msra.mxu0 0
        %1856 = vmatpush.bf16.msra.mxu0 0
        %1857 = vmatpush.bf16.msra.mxu0 0
        %1858 = vmatpush.bf16.msra.mxu0 %v963
        %1859 = vmatmul.bf16.gmra.mxu0 %v1664
        %v1860 = vpop.f32.mrf.mxu0
        %v1861 = vadd.f32 0.0, %v1860
        %v1862 = vpop.f32.mrf.mxu0
        %1863 = vdwg.mxu0
        %1864 = vmatpush.bf16.msra.mxu0 0
        %1865 = vmatpush.bf16.msra.mxu0 0
        %1866 = vmatpush.bf16.msra.mxu0 0
        %1867 = vmatpush.bf16.msra.mxu0 0
        %1868 = vmatpush.bf16.msra.mxu0 0
        %1869 = vmatpush.bf16.msra.mxu0 0
        %1870 = vmatpush.bf16.msra.mxu0 0
        %1871 = vmatpush.bf16.msra.mxu0 %v1667
        %1872 = vmatmul.bf16.gmra.mxu0 %v1664
        %v1873 = vpop.f32.mrf.mxu0
        %v1874 = vadd.f32 0.0, %v1873
        %v1875 = vpop.f32.mrf.mxu0
        %1876 = vdwg.mxu0
        %v1877 = vadd.f32 %v1642, %v1679
        %v1878 = vadd.f32 %v1643, %v1692
        %v1879 = vadd.f32 %v1644, %v1705
        %v1880 = vadd.f32 %v1645, %v1718
        %v1881 = vadd.f32 %v1646, %v1731
        %v1882 = vadd.f32 %v1647, %v1744
        %v1883 = vadd.f32 %v1648, %v1757
        %v1884 = vadd.f32 %v1649, %v1770
        %v1885 = vadd.f32 %v1650, %v1783
        %v1886 = vadd.f32 %v1651, %v1796
        %v1887 = vadd.f32 %v1652, %v1809
        %v1888 = vadd.f32 %v1653, %v1822
        %v1889 = vadd.f32 %v1654, %v1835
        %v1890 = vadd.f32 %v1655, %v1848
        %v1891 = vadd.f32 %v1656, %v1861
        %v1892 = vadd.f32 %v1657, %v1874
        %s1893 = scalar_lea.vmem %s1, 24
        %v1894 = vld [vmem:[%s1893] sm:$0xf]
        %v1896 = vsel %vm341, %v1894, 0
        %v1899 = vsel %vm345, %v1424, 0
        %1901 = vmatpush.bf16.msra.mxu0 0
        %1902 = vmatpush.bf16.msra.mxu0 0
        %1903 = vmatpush.bf16.msra.mxu0 0
        %1904 = vmatpush.bf16.msra.mxu0 0
        %1905 = vmatpush.bf16.msra.mxu0 0
        %1906 = vmatpush.bf16.msra.mxu0 0
        %1907 = vmatpush.bf16.msra.mxu0 0
        %1908 = vmatpush.bf16.msra.mxu0 %v612
        %1909 = vmatmul.bf16.gmra.mxu0 %v1896
        %v1910 = vpop.f32.mrf.mxu0
        %v1911 = vadd.f32 0.0, %v1910
        %v1912 = vpop.f32.mrf.mxu0
        %1913 = vdwg.mxu0
        %1914 = vmatpush.bf16.msra.mxu0 0
        %1915 = vmatpush.bf16.msra.mxu0 0
        %1916 = vmatpush.bf16.msra.mxu0 0
        %1917 = vmatpush.bf16.msra.mxu0 0
        %1918 = vmatpush.bf16.msra.mxu0 0
        %1919 = vmatpush.bf16.msra.mxu0 0
        %1920 = vmatpush.bf16.msra.mxu0 0
        %1921 = vmatpush.bf16.msra.mxu0 %v615
        %1922 = vmatmul.bf16.gmra.mxu0 %v1896
        %v1923 = vpop.f32.mrf.mxu0
        %v1924 = vadd.f32 0.0, %v1923
        %v1925 = vpop.f32.mrf.mxu0
        %1926 = vdwg.mxu0
        %1927 = vmatpush.bf16.msra.mxu0 0
        %1928 = vmatpush.bf16.msra.mxu0 0
        %1929 = vmatpush.bf16.msra.mxu0 0
        %1930 = vmatpush.bf16.msra.mxu0 0
        %1931 = vmatpush.bf16.msra.mxu0 0
        %1932 = vmatpush.bf16.msra.mxu0 0
        %1933 = vmatpush.bf16.msra.mxu0 0
        %1934 = vmatpush.bf16.msra.mxu0 %v618
        %1935 = vmatmul.bf16.gmra.mxu0 %v1896
        %v1936 = vpop.f32.mrf.mxu0
        %v1937 = vadd.f32 0.0, %v1936
        %v1938 = vpop.f32.mrf.mxu0
        %1939 = vdwg.mxu0
        %1940 = vmatpush.bf16.msra.mxu0 0
        %1941 = vmatpush.bf16.msra.mxu0 0
        %1942 = vmatpush.bf16.msra.mxu0 0
        %1943 = vmatpush.bf16.msra.mxu0 0
        %1944 = vmatpush.bf16.msra.mxu0 0
        %1945 = vmatpush.bf16.msra.mxu0 0
        %1946 = vmatpush.bf16.msra.mxu0 0
        %1947 = vmatpush.bf16.msra.mxu0 %v621
        %1948 = vmatmul.bf16.gmra.mxu0 %v1896
        %v1949 = vpop.f32.mrf.mxu0
        %v1950 = vadd.f32 0.0, %v1949
        %v1951 = vpop.f32.mrf.mxu0
        %1952 = vdwg.mxu0
        %1953 = vmatpush.bf16.msra.mxu0 0
        %1954 = vmatpush.bf16.msra.mxu0 0
        %1955 = vmatpush.bf16.msra.mxu0 0
        %1956 = vmatpush.bf16.msra.mxu0 0
        %1957 = vmatpush.bf16.msra.mxu0 0
        %1958 = vmatpush.bf16.msra.mxu0 0
        %1959 = vmatpush.bf16.msra.mxu0 0
        %1960 = vmatpush.bf16.msra.mxu0 %v624
        %1961 = vmatmul.bf16.gmra.mxu0 %v1896
        %v1962 = vpop.f32.mrf.mxu0
        %v1963 = vadd.f32 0.0, %v1962
        %v1964 = vpop.f32.mrf.mxu0
        %1965 = vdwg.mxu0
        %1966 = vmatpush.bf16.msra.mxu0 0
        %1967 = vmatpush.bf16.msra.mxu0 0
        %1968 = vmatpush.bf16.msra.mxu0 0
        %1969 = vmatpush.bf16.msra.mxu0 0
        %1970 = vmatpush.bf16.msra.mxu0 0
        %1971 = vmatpush.bf16.msra.mxu0 0
        %1972 = vmatpush.bf16.msra.mxu0 0
        %1973 = vmatpush.bf16.msra.mxu0 %v627
        %1974 = vmatmul.bf16.gmra.mxu0 %v1896
        %v1975 = vpop.f32.mrf.mxu0
        %v1976 = vadd.f32 0.0, %v1975
        %v1977 = vpop.f32.mrf.mxu0
        %1978 = vdwg.mxu0
        %1979 = vmatpush.bf16.msra.mxu0 0
        %1980 = vmatpush.bf16.msra.mxu0 0
        %1981 = vmatpush.bf16.msra.mxu0 0
        %1982 = vmatpush.bf16.msra.mxu0 0
        %1983 = vmatpush.bf16.msra.mxu0 0
        %1984 = vmatpush.bf16.msra.mxu0 0
        %1985 = vmatpush.bf16.msra.mxu0 0
        %1986 = vmatpush.bf16.msra.mxu0 %v630
        %1987 = vmatmul.bf16.gmra.mxu0 %v1896
        %v1988 = vpop.f32.mrf.mxu0
        %v1989 = vadd.f32 0.0, %v1988
        %v1990 = vpop.f32.mrf.mxu0
        %1991 = vdwg.mxu0
        %1992 = vmatpush.bf16.msra.mxu0 0
        %1993 = vmatpush.bf16.msra.mxu0 0
        %1994 = vmatpush.bf16.msra.mxu0 0
        %1995 = vmatpush.bf16.msra.mxu0 0
        %1996 = vmatpush.bf16.msra.mxu0 0
        %1997 = vmatpush.bf16.msra.mxu0 0
        %1998 = vmatpush.bf16.msra.mxu0 0
        %1999 = vmatpush.bf16.msra.mxu0 %v633
        %2000 = vmatmul.bf16.gmra.mxu0 %v1896
        %v2001 = vpop.f32.mrf.mxu0
        %v2002 = vadd.f32 0.0, %v2001
        %v2003 = vpop.f32.mrf.mxu0
        %2004 = vdwg.mxu0
        %2005 = vmatpush.bf16.msra.mxu0 0
        %2006 = vmatpush.bf16.msra.mxu0 0
        %2007 = vmatpush.bf16.msra.mxu0 0
        %2008 = vmatpush.bf16.msra.mxu0 0
        %2009 = vmatpush.bf16.msra.mxu0 0
        %2010 = vmatpush.bf16.msra.mxu0 0
        %2011 = vmatpush.bf16.msra.mxu0 0
        %2012 = vmatpush.bf16.msra.mxu0 %v636
        %2013 = vmatmul.bf16.gmra.mxu0 %v1896
        %v2014 = vpop.f32.mrf.mxu0
        %v2015 = vadd.f32 0.0, %v2014
        %v2016 = vpop.f32.mrf.mxu0
        %2017 = vdwg.mxu0
        %2018 = vmatpush.bf16.msra.mxu0 0
        %2019 = vmatpush.bf16.msra.mxu0 0
        %2020 = vmatpush.bf16.msra.mxu0 0
        %2021 = vmatpush.bf16.msra.mxu0 0
        %2022 = vmatpush.bf16.msra.mxu0 0
        %2023 = vmatpush.bf16.msra.mxu0 0
        %2024 = vmatpush.bf16.msra.mxu0 0
        %2025 = vmatpush.bf16.msra.mxu0 %v639
        %2026 = vmatmul.bf16.gmra.mxu0 %v1896
        %v2027 = vpop.f32.mrf.mxu0
        %v2028 = vadd.f32 0.0, %v2027
        %v2029 = vpop.f32.mrf.mxu0
        %2030 = vdwg.mxu0
        %2031 = vmatpush.bf16.msra.mxu0 0
        %2032 = vmatpush.bf16.msra.mxu0 0
        %2033 = vmatpush.bf16.msra.mxu0 0
        %2034 = vmatpush.bf16.msra.mxu0 0
        %2035 = vmatpush.bf16.msra.mxu0 0
        %2036 = vmatpush.bf16.msra.mxu0 0
        %2037 = vmatpush.bf16.msra.mxu0 0
        %2038 = vmatpush.bf16.msra.mxu0 %v642
        %2039 = vmatmul.bf16.gmra.mxu0 %v1896
        %v2040 = vpop.f32.mrf.mxu0
        %v2041 = vadd.f32 0.0, %v2040
        %v2042 = vpop.f32.mrf.mxu0
        %2043 = vdwg.mxu0
        %2044 = vmatpush.bf16.msra.mxu0 0
        %2045 = vmatpush.bf16.msra.mxu0 0
        %2046 = vmatpush.bf16.msra.mxu0 0
        %2047 = vmatpush.bf16.msra.mxu0 0
        %2048 = vmatpush.bf16.msra.mxu0 0
        %2049 = vmatpush.bf16.msra.mxu0 0
        %2050 = vmatpush.bf16.msra.mxu0 0
        %2051 = vmatpush.bf16.msra.mxu0 %v645
        %2052 = vmatmul.bf16.gmra.mxu0 %v1896
        %v2053 = vpop.f32.mrf.mxu0
        %v2054 = vadd.f32 0.0, %v2053
        %v2055 = vpop.f32.mrf.mxu0
        %2056 = vdwg.mxu0
        %2057 = vmatpush.bf16.msra.mxu0 0
        %2058 = vmatpush.bf16.msra.mxu0 0
        %2059 = vmatpush.bf16.msra.mxu0 0
        %2060 = vmatpush.bf16.msra.mxu0 0
        %2061 = vmatpush.bf16.msra.mxu0 0
        %2062 = vmatpush.bf16.msra.mxu0 0
        %2063 = vmatpush.bf16.msra.mxu0 0
        %2064 = vmatpush.bf16.msra.mxu0 %v648
        %2065 = vmatmul.bf16.gmra.mxu0 %v1896
        %v2066 = vpop.f32.mrf.mxu0
        %v2067 = vadd.f32 0.0, %v2066
        %v2068 = vpop.f32.mrf.mxu0
        %2069 = vdwg.mxu0
        %2070 = vmatpush.bf16.msra.mxu0 0
        %2071 = vmatpush.bf16.msra.mxu0 0
        %2072 = vmatpush.bf16.msra.mxu0 0
        %2073 = vmatpush.bf16.msra.mxu0 0
        %2074 = vmatpush.bf16.msra.mxu0 0
        %2075 = vmatpush.bf16.msra.mxu0 0
        %2076 = vmatpush.bf16.msra.mxu0 0
        %2077 = vmatpush.bf16.msra.mxu0 %v651
        %2078 = vmatmul.bf16.gmra.mxu0 %v1896
        %v2079 = vpop.f32.mrf.mxu0
        %v2080 = vadd.f32 0.0, %v2079
        %v2081 = vpop.f32.mrf.mxu0
        %2082 = vdwg.mxu0
        %2083 = vmatpush.bf16.msra.mxu0 0
        %2084 = vmatpush.bf16.msra.mxu0 0
        %2085 = vmatpush.bf16.msra.mxu0 0
        %2086 = vmatpush.bf16.msra.mxu0 0
        %2087 = vmatpush.bf16.msra.mxu0 0
        %2088 = vmatpush.bf16.msra.mxu0 0
        %2089 = vmatpush.bf16.msra.mxu0 0
        %2090 = vmatpush.bf16.msra.mxu0 %v1195
        %2091 = vmatmul.bf16.gmra.mxu0 %v1896
        %v2092 = vpop.f32.mrf.mxu0
        %v2093 = vadd.f32 0.0, %v2092
        %v2094 = vpop.f32.mrf.mxu0
        %2095 = vdwg.mxu0
        %2096 = vmatpush.bf16.msra.mxu0 0
        %2097 = vmatpush.bf16.msra.mxu0 0
        %2098 = vmatpush.bf16.msra.mxu0 0
        %2099 = vmatpush.bf16.msra.mxu0 0
        %2100 = vmatpush.bf16.msra.mxu0 0
        %2101 = vmatpush.bf16.msra.mxu0 0
        %2102 = vmatpush.bf16.msra.mxu0 0
        %2103 = vmatpush.bf16.msra.mxu0 %v1899
        %2104 = vmatmul.bf16.gmra.mxu0 %v1896
        %v2105 = vpop.f32.mrf.mxu0
        %v2106 = vadd.f32 0.0, %v2105
        %v2107 = vpop.f32.mrf.mxu0
        %2108 = vdwg.mxu0
        %v2109 = vadd.f32 %v1877, %v1911
        %v2110 = vadd.f32 %v1878, %v1924
        %v2111 = vadd.f32 %v1879, %v1937
        %v2112 = vadd.f32 %v1880, %v1950
        %v2113 = vadd.f32 %v1881, %v1963
        %v2114 = vadd.f32 %v1882, %v1976
        %v2115 = vadd.f32 %v1883, %v1989
        %v2116 = vadd.f32 %v1884, %v2002
        %v2117 = vadd.f32 %v1885, %v2015
        %v2118 = vadd.f32 %v1886, %v2028
        %v2119 = vadd.f32 %v1887, %v2041
        %v2120 = vadd.f32 %v1888, %v2054
        %v2121 = vadd.f32 %v1889, %v2067
        %v2122 = vadd.f32 %v1890, %v2080
        %v2123 = vadd.f32 %v1891, %v2093
        %v2124 = vadd.f32 %v1892, %v2106
        %s2125 = scalar_lea.vmem %s1, 28
        %v2126 = vld [vmem:[%s2125] sm:$0xf]
        %v2128 = vunpack.c.l.b16 %v243
        %v2129 = vpack.c.b16 %v2128, %v2128
        %2130 = vrot.lane.b32.xlu0 %v2129, 127
        %v2131 = vpop.permute.xlu0 %2130
        %v2132 = vsel %vm324, %v1426, %v2131
        %v2134 = vsel %vm341, %v2126, 0
        %v2137 = vsel %vm345, %v2132, 0
        %2139 = vmatpush.bf16.msra.mxu0 0
        %2140 = vmatpush.bf16.msra.mxu0 0
        %2141 = vmatpush.bf16.msra.mxu0 0
        %2142 = vmatpush.bf16.msra.mxu0 0
        %2143 = vmatpush.bf16.msra.mxu0 0
        %2144 = vmatpush.bf16.msra.mxu0 0
        %2145 = vmatpush.bf16.msra.mxu0 0
        %2146 = vmatpush.bf16.msra.mxu0 %v353
        %2147 = vmatmul.bf16.gmra.mxu0 %v2134
        %v2148 = vpop.f32.mrf.mxu0
        %v2149 = vadd.f32 0.0, %v2148
        %v2150 = vpop.f32.mrf.mxu0
        %2151 = vdwg.mxu0
        %2152 = vmatpush.bf16.msra.mxu0 0
        %2153 = vmatpush.bf16.msra.mxu0 0
        %2154 = vmatpush.bf16.msra.mxu0 0
        %2155 = vmatpush.bf16.msra.mxu0 0
        %2156 = vmatpush.bf16.msra.mxu0 0
        %2157 = vmatpush.bf16.msra.mxu0 0
        %2158 = vmatpush.bf16.msra.mxu0 0
        %2159 = vmatpush.bf16.msra.mxu0 %v356
        %2160 = vmatmul.bf16.gmra.mxu0 %v2134
        %v2161 = vpop.f32.mrf.mxu0
        %v2162 = vadd.f32 0.0, %v2161
        %v2163 = vpop.f32.mrf.mxu0
        %2164 = vdwg.mxu0
        %2165 = vmatpush.bf16.msra.mxu0 0
        %2166 = vmatpush.bf16.msra.mxu0 0
        %2167 = vmatpush.bf16.msra.mxu0 0
        %2168 = vmatpush.bf16.msra.mxu0 0
        %2169 = vmatpush.bf16.msra.mxu0 0
        %2170 = vmatpush.bf16.msra.mxu0 0
        %2171 = vmatpush.bf16.msra.mxu0 0
        %2172 = vmatpush.bf16.msra.mxu0 %v359
        %2173 = vmatmul.bf16.gmra.mxu0 %v2134
        %v2174 = vpop.f32.mrf.mxu0
        %v2175 = vadd.f32 0.0, %v2174
        %v2176 = vpop.f32.mrf.mxu0
        %2177 = vdwg.mxu0
        %2178 = vmatpush.bf16.msra.mxu0 0
        %2179 = vmatpush.bf16.msra.mxu0 0
        %2180 = vmatpush.bf16.msra.mxu0 0
        %2181 = vmatpush.bf16.msra.mxu0 0
        %2182 = vmatpush.bf16.msra.mxu0 0
        %2183 = vmatpush.bf16.msra.mxu0 0
        %2184 = vmatpush.bf16.msra.mxu0 0
        %2185 = vmatpush.bf16.msra.mxu0 %v362
        %2186 = vmatmul.bf16.gmra.mxu0 %v2134
        %v2187 = vpop.f32.mrf.mxu0
        %v2188 = vadd.f32 0.0, %v2187
        %v2189 = vpop.f32.mrf.mxu0
        %2190 = vdwg.mxu0
        %2191 = vmatpush.bf16.msra.mxu0 0
        %2192 = vmatpush.bf16.msra.mxu0 0
        %2193 = vmatpush.bf16.msra.mxu0 0
        %2194 = vmatpush.bf16.msra.mxu0 0
        %2195 = vmatpush.bf16.msra.mxu0 0
        %2196 = vmatpush.bf16.msra.mxu0 0
        %2197 = vmatpush.bf16.msra.mxu0 0
        %2198 = vmatpush.bf16.msra.mxu0 %v365
        %2199 = vmatmul.bf16.gmra.mxu0 %v2134
        %v2200 = vpop.f32.mrf.mxu0
        %v2201 = vadd.f32 0.0, %v2200
        %v2202 = vpop.f32.mrf.mxu0
        %2203 = vdwg.mxu0
        %2204 = vmatpush.bf16.msra.mxu0 0
        %2205 = vmatpush.bf16.msra.mxu0 0
        %2206 = vmatpush.bf16.msra.mxu0 0
        %2207 = vmatpush.bf16.msra.mxu0 0
        %2208 = vmatpush.bf16.msra.mxu0 0
        %2209 = vmatpush.bf16.msra.mxu0 0
        %2210 = vmatpush.bf16.msra.mxu0 0
        %2211 = vmatpush.bf16.msra.mxu0 %v368
        %2212 = vmatmul.bf16.gmra.mxu0 %v2134
        %v2213 = vpop.f32.mrf.mxu0
        %v2214 = vadd.f32 0.0, %v2213
        %v2215 = vpop.f32.mrf.mxu0
        %2216 = vdwg.mxu0
        %2217 = vmatpush.bf16.msra.mxu0 0
        %2218 = vmatpush.bf16.msra.mxu0 0
        %2219 = vmatpush.bf16.msra.mxu0 0
        %2220 = vmatpush.bf16.msra.mxu0 0
        %2221 = vmatpush.bf16.msra.mxu0 0
        %2222 = vmatpush.bf16.msra.mxu0 0
        %2223 = vmatpush.bf16.msra.mxu0 0
        %2224 = vmatpush.bf16.msra.mxu0 %v371
        %2225 = vmatmul.bf16.gmra.mxu0 %v2134
        %v2226 = vpop.f32.mrf.mxu0
        %v2227 = vadd.f32 0.0, %v2226
        %v2228 = vpop.f32.mrf.mxu0
        %2229 = vdwg.mxu0
        %2230 = vmatpush.bf16.msra.mxu0 0
        %2231 = vmatpush.bf16.msra.mxu0 0
        %2232 = vmatpush.bf16.msra.mxu0 0
        %2233 = vmatpush.bf16.msra.mxu0 0
        %2234 = vmatpush.bf16.msra.mxu0 0
        %2235 = vmatpush.bf16.msra.mxu0 0
        %2236 = vmatpush.bf16.msra.mxu0 0
        %2237 = vmatpush.bf16.msra.mxu0 %v374
        %2238 = vmatmul.bf16.gmra.mxu0 %v2134
        %v2239 = vpop.f32.mrf.mxu0
        %v2240 = vadd.f32 0.0, %v2239
        %v2241 = vpop.f32.mrf.mxu0
        %2242 = vdwg.mxu0
        %2243 = vmatpush.bf16.msra.mxu0 0
        %2244 = vmatpush.bf16.msra.mxu0 0
        %2245 = vmatpush.bf16.msra.mxu0 0
        %2246 = vmatpush.bf16.msra.mxu0 0
        %2247 = vmatpush.bf16.msra.mxu0 0
        %2248 = vmatpush.bf16.msra.mxu0 0
        %2249 = vmatpush.bf16.msra.mxu0 0
        %2250 = vmatpush.bf16.msra.mxu0 %v377
        %2251 = vmatmul.bf16.gmra.mxu0 %v2134
        %v2252 = vpop.f32.mrf.mxu0
        %v2253 = vadd.f32 0.0, %v2252
        %v2254 = vpop.f32.mrf.mxu0
        %2255 = vdwg.mxu0
        %2256 = vmatpush.bf16.msra.mxu0 0
        %2257 = vmatpush.bf16.msra.mxu0 0
        %2258 = vmatpush.bf16.msra.mxu0 0
        %2259 = vmatpush.bf16.msra.mxu0 0
        %2260 = vmatpush.bf16.msra.mxu0 0
        %2261 = vmatpush.bf16.msra.mxu0 0
        %2262 = vmatpush.bf16.msra.mxu0 0
        %2263 = vmatpush.bf16.msra.mxu0 %v380
        %2264 = vmatmul.bf16.gmra.mxu0 %v2134
        %v2265 = vpop.f32.mrf.mxu0
        %v2266 = vadd.f32 0.0, %v2265
        %v2267 = vpop.f32.mrf.mxu0
        %2268 = vdwg.mxu0
        %2269 = vmatpush.bf16.msra.mxu0 0
        %2270 = vmatpush.bf16.msra.mxu0 0
        %2271 = vmatpush.bf16.msra.mxu0 0
        %2272 = vmatpush.bf16.msra.mxu0 0
        %2273 = vmatpush.bf16.msra.mxu0 0
        %2274 = vmatpush.bf16.msra.mxu0 0
        %2275 = vmatpush.bf16.msra.mxu0 0
        %2276 = vmatpush.bf16.msra.mxu0 %v383
        %2277 = vmatmul.bf16.gmra.mxu0 %v2134
        %v2278 = vpop.f32.mrf.mxu0
        %v2279 = vadd.f32 0.0, %v2278
        %v2280 = vpop.f32.mrf.mxu0
        %2281 = vdwg.mxu0
        %2282 = vmatpush.bf16.msra.mxu0 0
        %2283 = vmatpush.bf16.msra.mxu0 0
        %2284 = vmatpush.bf16.msra.mxu0 0
        %2285 = vmatpush.bf16.msra.mxu0 0
        %2286 = vmatpush.bf16.msra.mxu0 0
        %2287 = vmatpush.bf16.msra.mxu0 0
        %2288 = vmatpush.bf16.msra.mxu0 0
        %2289 = vmatpush.bf16.msra.mxu0 %v386
        %2290 = vmatmul.bf16.gmra.mxu0 %v2134
        %v2291 = vpop.f32.mrf.mxu0
        %v2292 = vadd.f32 0.0, %v2291
        %v2293 = vpop.f32.mrf.mxu0
        %2294 = vdwg.mxu0
        %2295 = vmatpush.bf16.msra.mxu0 0
        %2296 = vmatpush.bf16.msra.mxu0 0
        %2297 = vmatpush.bf16.msra.mxu0 0
        %2298 = vmatpush.bf16.msra.mxu0 0
        %2299 = vmatpush.bf16.msra.mxu0 0
        %2300 = vmatpush.bf16.msra.mxu0 0
        %2301 = vmatpush.bf16.msra.mxu0 0
        %2302 = vmatpush.bf16.msra.mxu0 %v389
        %2303 = vmatmul.bf16.gmra.mxu0 %v2134
        %v2304 = vpop.f32.mrf.mxu0
        %v2305 = vadd.f32 0.0, %v2304
        %v2306 = vpop.f32.mrf.mxu0
        %2307 = vdwg.mxu0
        %2308 = vmatpush.bf16.msra.mxu0 0
        %2309 = vmatpush.bf16.msra.mxu0 0
        %2310 = vmatpush.bf16.msra.mxu0 0
        %2311 = vmatpush.bf16.msra.mxu0 0
        %2312 = vmatpush.bf16.msra.mxu0 0
        %2313 = vmatpush.bf16.msra.mxu0 0
        %2314 = vmatpush.bf16.msra.mxu0 0
        %2315 = vmatpush.bf16.msra.mxu0 %v392
        %2316 = vmatmul.bf16.gmra.mxu0 %v2134
        %v2317 = vpop.f32.mrf.mxu0
        %v2318 = vadd.f32 0.0, %v2317
        %v2319 = vpop.f32.mrf.mxu0
        %2320 = vdwg.mxu0
        %2321 = vmatpush.bf16.msra.mxu0 0
        %2322 = vmatpush.bf16.msra.mxu0 0
        %2323 = vmatpush.bf16.msra.mxu0 0
        %2324 = vmatpush.bf16.msra.mxu0 0
        %2325 = vmatpush.bf16.msra.mxu0 0
        %2326 = vmatpush.bf16.msra.mxu0 0
        %2327 = vmatpush.bf16.msra.mxu0 0
        %2328 = vmatpush.bf16.msra.mxu0 %v1432
        %2329 = vmatmul.bf16.gmra.mxu0 %v2134
        %v2330 = vpop.f32.mrf.mxu0
        %v2331 = vadd.f32 0.0, %v2330
        %v2332 = vpop.f32.mrf.mxu0
        %2333 = vdwg.mxu0
        %2334 = vmatpush.bf16.msra.mxu0 0
        %2335 = vmatpush.bf16.msra.mxu0 0
        %2336 = vmatpush.bf16.msra.mxu0 0
        %2337 = vmatpush.bf16.msra.mxu0 0
        %2338 = vmatpush.bf16.msra.mxu0 0
        %2339 = vmatpush.bf16.msra.mxu0 0
        %2340 = vmatpush.bf16.msra.mxu0 0
        %2341 = vmatpush.bf16.msra.mxu0 %v2137
        %2342 = vmatmul.bf16.gmra.mxu0 %v2134
        %v2343 = vpop.f32.mrf.mxu0
        %v2344 = vadd.f32 0.0, %v2343
        %v2345 = vpop.f32.mrf.mxu0
        %2346 = vdwg.mxu0
        %v2347 = vadd.f32 %v2109, %v2149
        %v2348 = vadd.f32 %v2110, %v2162
        %v2349 = vadd.f32 %v2111, %v2175
        %v2350 = vadd.f32 %v2112, %v2188
        %v2351 = vadd.f32 %v2113, %v2201
        %v2352 = vadd.f32 %v2114, %v2214
        %v2353 = vadd.f32 %v2115, %v2227
        %v2354 = vadd.f32 %v2116, %v2240
        %v2355 = vadd.f32 %v2117, %v2253
        %v2356 = vadd.f32 %v2118, %v2266
        %v2357 = vadd.f32 %v2119, %v2279
        %v2358 = vadd.f32 %v2120, %v2292
        %v2359 = vadd.f32 %v2121, %v2305
        %v2360 = vadd.f32 %v2122, %v2318
        %v2361 = vadd.f32 %v2123, %v2331
        %v2362 = vadd.f32 %v2124, %v2344
        %s2363 = scalar_lea.vmem %s1, 32
        %v2364 = vld [vmem:[%s2363] sm:$0xf]
        %2365 = vrot.lane.b32.xlu0 %v2129, 126
        %v2366 = vpop.permute.xlu0 %2365
        %v2367 = vsel %vm897, %v1661, %v2366
        %v2369 = vsel %vm341, %v2364, 0
        %v2372 = vsel %vm345, %v2367, 0
        %2374 = vmatpush.bf16.msra.mxu0 0
        %2375 = vmatpush.bf16.msra.mxu0 0
        %2376 = vmatpush.bf16.msra.mxu0 0
        %2377 = vmatpush.bf16.msra.mxu0 0
        %2378 = vmatpush.bf16.msra.mxu0 0
        %2379 = vmatpush.bf16.msra.mxu0 0
        %2380 = vmatpush.bf16.msra.mxu0 0
        %2381 = vmatpush.bf16.msra.mxu0 %v924
        %2382 = vmatmul.bf16.gmra.mxu0 %v2369
        %v2383 = vpop.f32.mrf.mxu0
        %v2384 = vadd.f32 0.0, %v2383
        %v2385 = vpop.f32.mrf.mxu0
        %2386 = vdwg.mxu0
        %2387 = vmatpush.bf16.msra.mxu0 0
        %2388 = vmatpush.bf16.msra.mxu0 0
        %2389 = vmatpush.bf16.msra.mxu0 0
        %2390 = vmatpush.bf16.msra.mxu0 0
        %2391 = vmatpush.bf16.msra.mxu0 0
        %2392 = vmatpush.bf16.msra.mxu0 0
        %2393 = vmatpush.bf16.msra.mxu0 0
        %2394 = vmatpush.bf16.msra.mxu0 %v927
        %2395 = vmatmul.bf16.gmra.mxu0 %v2369
        %v2396 = vpop.f32.mrf.mxu0
        %v2397 = vadd.f32 0.0, %v2396
        %v2398 = vpop.f32.mrf.mxu0
        %2399 = vdwg.mxu0
        %2400 = vmatpush.bf16.msra.mxu0 0
        %2401 = vmatpush.bf16.msra.mxu0 0
        %2402 = vmatpush.bf16.msra.mxu0 0
        %2403 = vmatpush.bf16.msra.mxu0 0
        %2404 = vmatpush.bf16.msra.mxu0 0
        %2405 = vmatpush.bf16.msra.mxu0 0
        %2406 = vmatpush.bf16.msra.mxu0 0
        %2407 = vmatpush.bf16.msra.mxu0 %v930
        %2408 = vmatmul.bf16.gmra.mxu0 %v2369
        %v2409 = vpop.f32.mrf.mxu0
        %v2410 = vadd.f32 0.0, %v2409
        %v2411 = vpop.f32.mrf.mxu0
        %2412 = vdwg.mxu0
        %2413 = vmatpush.bf16.msra.mxu0 0
        %2414 = vmatpush.bf16.msra.mxu0 0
        %2415 = vmatpush.bf16.msra.mxu0 0
        %2416 = vmatpush.bf16.msra.mxu0 0
        %2417 = vmatpush.bf16.msra.mxu0 0
        %2418 = vmatpush.bf16.msra.mxu0 0
        %2419 = vmatpush.bf16.msra.mxu0 0
        %2420 = vmatpush.bf16.msra.mxu0 %v933
        %2421 = vmatmul.bf16.gmra.mxu0 %v2369
        %v2422 = vpop.f32.mrf.mxu0
        %v2423 = vadd.f32 0.0, %v2422
        %v2424 = vpop.f32.mrf.mxu0
        %2425 = vdwg.mxu0
        %2426 = vmatpush.bf16.msra.mxu0 0
        %2427 = vmatpush.bf16.msra.mxu0 0
        %2428 = vmatpush.bf16.msra.mxu0 0
        %2429 = vmatpush.bf16.msra.mxu0 0
        %2430 = vmatpush.bf16.msra.mxu0 0
        %2431 = vmatpush.bf16.msra.mxu0 0
        %2432 = vmatpush.bf16.msra.mxu0 0
        %2433 = vmatpush.bf16.msra.mxu0 %v936
        %2434 = vmatmul.bf16.gmra.mxu0 %v2369
        %v2435 = vpop.f32.mrf.mxu0
        %v2436 = vadd.f32 0.0, %v2435
        %v2437 = vpop.f32.mrf.mxu0
        %2438 = vdwg.mxu0
        %2439 = vmatpush.bf16.msra.mxu0 0
        %2440 = vmatpush.bf16.msra.mxu0 0
        %2441 = vmatpush.bf16.msra.mxu0 0
        %2442 = vmatpush.bf16.msra.mxu0 0
        %2443 = vmatpush.bf16.msra.mxu0 0
        %2444 = vmatpush.bf16.msra.mxu0 0
        %2445 = vmatpush.bf16.msra.mxu0 0
        %2446 = vmatpush.bf16.msra.mxu0 %v939
        %2447 = vmatmul.bf16.gmra.mxu0 %v2369
        %v2448 = vpop.f32.mrf.mxu0
        %v2449 = vadd.f32 0.0, %v2448
        %v2450 = vpop.f32.mrf.mxu0
        %2451 = vdwg.mxu0
        %2452 = vmatpush.bf16.msra.mxu0 0
        %2453 = vmatpush.bf16.msra.mxu0 0
        %2454 = vmatpush.bf16.msra.mxu0 0
        %2455 = vmatpush.bf16.msra.mxu0 0
        %2456 = vmatpush.bf16.msra.mxu0 0
        %2457 = vmatpush.bf16.msra.mxu0 0
        %2458 = vmatpush.bf16.msra.mxu0 0
        %2459 = vmatpush.bf16.msra.mxu0 %v942
        %2460 = vmatmul.bf16.gmra.mxu0 %v2369
        %v2461 = vpop.f32.mrf.mxu0
        %v2462 = vadd.f32 0.0, %v2461
        %v2463 = vpop.f32.mrf.mxu0
        %2464 = vdwg.mxu0
        %2465 = vmatpush.bf16.msra.mxu0 0
        %2466 = vmatpush.bf16.msra.mxu0 0
        %2467 = vmatpush.bf16.msra.mxu0 0
        %2468 = vmatpush.bf16.msra.mxu0 0
        %2469 = vmatpush.bf16.msra.mxu0 0
        %2470 = vmatpush.bf16.msra.mxu0 0
        %2471 = vmatpush.bf16.msra.mxu0 0
        %2472 = vmatpush.bf16.msra.mxu0 %v945
        %2473 = vmatmul.bf16.gmra.mxu0 %v2369
        %v2474 = vpop.f32.mrf.mxu0
        %v2475 = vadd.f32 0.0, %v2474
        %v2476 = vpop.f32.mrf.mxu0
        %2477 = vdwg.mxu0
        %2478 = vmatpush.bf16.msra.mxu0 0
        %2479 = vmatpush.bf16.msra.mxu0 0
        %2480 = vmatpush.bf16.msra.mxu0 0
        %2481 = vmatpush.bf16.msra.mxu0 0
        %2482 = vmatpush.bf16.msra.mxu0 0
        %2483 = vmatpush.bf16.msra.mxu0 0
        %2484 = vmatpush.bf16.msra.mxu0 0
        %2485 = vmatpush.bf16.msra.mxu0 %v948
        %2486 = vmatmul.bf16.gmra.mxu0 %v2369
        %v2487 = vpop.f32.mrf.mxu0
        %v2488 = vadd.f32 0.0, %v2487
        %v2489 = vpop.f32.mrf.mxu0
        %2490 = vdwg.mxu0
        %2491 = vmatpush.bf16.msra.mxu0 0
        %2492 = vmatpush.bf16.msra.mxu0 0
        %2493 = vmatpush.bf16.msra.mxu0 0
        %2494 = vmatpush.bf16.msra.mxu0 0
        %2495 = vmatpush.bf16.msra.mxu0 0
        %2496 = vmatpush.bf16.msra.mxu0 0
        %2497 = vmatpush.bf16.msra.mxu0 0
        %2498 = vmatpush.bf16.msra.mxu0 %v951
        %2499 = vmatmul.bf16.gmra.mxu0 %v2369
        %v2500 = vpop.f32.mrf.mxu0
        %v2501 = vadd.f32 0.0, %v2500
        %v2502 = vpop.f32.mrf.mxu0
        %2503 = vdwg.mxu0
        %2504 = vmatpush.bf16.msra.mxu0 0
        %2505 = vmatpush.bf16.msra.mxu0 0
        %2506 = vmatpush.bf16.msra.mxu0 0
        %2507 = vmatpush.bf16.msra.mxu0 0
        %2508 = vmatpush.bf16.msra.mxu0 0
        %2509 = vmatpush.bf16.msra.mxu0 0
        %2510 = vmatpush.bf16.msra.mxu0 0
        %2511 = vmatpush.bf16.msra.mxu0 %v954
        %2512 = vmatmul.bf16.gmra.mxu0 %v2369
        %v2513 = vpop.f32.mrf.mxu0
        %v2514 = vadd.f32 0.0, %v2513
        %v2515 = vpop.f32.mrf.mxu0
        %2516 = vdwg.mxu0
        %2517 = vmatpush.bf16.msra.mxu0 0
        %2518 = vmatpush.bf16.msra.mxu0 0
        %2519 = vmatpush.bf16.msra.mxu0 0
        %2520 = vmatpush.bf16.msra.mxu0 0
        %2521 = vmatpush.bf16.msra.mxu0 0
        %2522 = vmatpush.bf16.msra.mxu0 0
        %2523 = vmatpush.bf16.msra.mxu0 0
        %2524 = vmatpush.bf16.msra.mxu0 %v957
        %2525 = vmatmul.bf16.gmra.mxu0 %v2369
        %v2526 = vpop.f32.mrf.mxu0
        %v2527 = vadd.f32 0.0, %v2526
        %v2528 = vpop.f32.mrf.mxu0
        %2529 = vdwg.mxu0
        %2530 = vmatpush.bf16.msra.mxu0 0
        %2531 = vmatpush.bf16.msra.mxu0 0
        %2532 = vmatpush.bf16.msra.mxu0 0
        %2533 = vmatpush.bf16.msra.mxu0 0
        %2534 = vmatpush.bf16.msra.mxu0 0
        %2535 = vmatpush.bf16.msra.mxu0 0
        %2536 = vmatpush.bf16.msra.mxu0 0
        %2537 = vmatpush.bf16.msra.mxu0 %v960
        %2538 = vmatmul.bf16.gmra.mxu0 %v2369
        %v2539 = vpop.f32.mrf.mxu0
        %v2540 = vadd.f32 0.0, %v2539
        %v2541 = vpop.f32.mrf.mxu0
        %2542 = vdwg.mxu0
        %2543 = vmatpush.bf16.msra.mxu0 0
        %2544 = vmatpush.bf16.msra.mxu0 0
        %2545 = vmatpush.bf16.msra.mxu0 0
        %2546 = vmatpush.bf16.msra.mxu0 0
        %2547 = vmatpush.bf16.msra.mxu0 0
        %2548 = vmatpush.bf16.msra.mxu0 0
        %2549 = vmatpush.bf16.msra.mxu0 0
        %2550 = vmatpush.bf16.msra.mxu0 %v963
        %2551 = vmatmul.bf16.gmra.mxu0 %v2369
        %v2552 = vpop.f32.mrf.mxu0
        %v2553 = vadd.f32 0.0, %v2552
        %v2554 = vpop.f32.mrf.mxu0
        %2555 = vdwg.mxu0
        %2556 = vmatpush.bf16.msra.mxu0 0
        %2557 = vmatpush.bf16.msra.mxu0 0
        %2558 = vmatpush.bf16.msra.mxu0 0
        %2559 = vmatpush.bf16.msra.mxu0 0
        %2560 = vmatpush.bf16.msra.mxu0 0
        %2561 = vmatpush.bf16.msra.mxu0 0
        %2562 = vmatpush.bf16.msra.mxu0 0
        %2563 = vmatpush.bf16.msra.mxu0 %v1667
        %2564 = vmatmul.bf16.gmra.mxu0 %v2369
        %v2565 = vpop.f32.mrf.mxu0
        %v2566 = vadd.f32 0.0, %v2565
        %v2567 = vpop.f32.mrf.mxu0
        %2568 = vdwg.mxu0
        %2569 = vmatpush.bf16.msra.mxu0 0
        %2570 = vmatpush.bf16.msra.mxu0 0
        %2571 = vmatpush.bf16.msra.mxu0 0
        %2572 = vmatpush.bf16.msra.mxu0 0
        %2573 = vmatpush.bf16.msra.mxu0 0
        %2574 = vmatpush.bf16.msra.mxu0 0
        %2575 = vmatpush.bf16.msra.mxu0 0
        %2576 = vmatpush.bf16.msra.mxu0 %v2372
        %2577 = vmatmul.bf16.gmra.mxu0 %v2369
        %v2578 = vpop.f32.mrf.mxu0
        %v2579 = vadd.f32 0.0, %v2578
        %v2580 = vpop.f32.mrf.mxu0
        %2581 = vdwg.mxu0
        %v2582 = vadd.f32 %v2347, %v2384
        %v2583 = vadd.f32 %v2348, %v2397
        %v2584 = vadd.f32 %v2349, %v2410
        %v2585 = vadd.f32 %v2350, %v2423
        %v2586 = vadd.f32 %v2351, %v2436
        %v2587 = vadd.f32 %v2352, %v2449
        %v2588 = vadd.f32 %v2353, %v2462
        %v2589 = vadd.f32 %v2354, %v2475
        %v2590 = vadd.f32 %v2355, %v2488
        %v2591 = vadd.f32 %v2356, %v2501
        %v2592 = vadd.f32 %v2357, %v2514
        %v2593 = vadd.f32 %v2358, %v2527
        %v2594 = vadd.f32 %v2359, %v2540
        %v2595 = vadd.f32 %v2360, %v2553
        %v2596 = vadd.f32 %v2361, %v2566
        %v2597 = vadd.f32 %v2362, %v2579
        %v2598 = vld [vmem:[#allocation5] sm:$0xff]
        %v2599 = vld [vmem:[#allocation5 + $0x8] sm:$0xff]
        %v2600 = vld [vmem:[#allocation5 + $0x10] sm:$0xff]
        %v2601 = vld [vmem:[#allocation5 + $0x18] sm:$0xff]
        %v2602 = vld [vmem:[#allocation5 + $0x20] sm:$0xff]
        %v2603 = vld [vmem:[#allocation5 + $0x28] sm:$0xff]
        %v2604 = vld [vmem:[#allocation5 + $0x30] sm:$0xff]
        %v2605 = vld [vmem:[#allocation5 + $0x38] sm:$0xff]
        %v2606 = vld [vmem:[#allocation5 + $0x40] sm:$0xff]
        %v2607 = vld [vmem:[#allocation5 + $0x48] sm:$0xff]
        %v2608 = vld [vmem:[#allocation5 + $0x50] sm:$0xff]
        %v2609 = vld [vmem:[#allocation5 + $0x58] sm:$0xff]
        %v2610 = vld [vmem:[#allocation5 + $0x60] sm:$0xff]
        %v2611 = vld [vmem:[#allocation5 + $0x68] sm:$0xff]
        %v2612 = vld [vmem:[#allocation5 + $0x70] sm:$0xff]
        %v2613 = vld [vmem:[#allocation5 + $0x78] sm:$0xff]
        %v2614 = vld [vmem:[%s3] sm:$0xff]
        %v2615 = vadd.f32 %v2582, %v2583
        %2617 = vset.pattern.permute.xlu0 0
        %2618 = vperm.xlu0 %2617, %v2614
        %v2619 = vpop.permute.xlu0 %2618
        %2621 = vmatpush.msra.mxu0 %v2613
        %2622 = vmatpush.msra.mxu0 %v2612
        %2623 = vmatpush.msra.mxu0 %v2611
        %2624 = vmatpush.msra.mxu0 %v2610
        %2625 = vmatpush.msra.mxu0 %v2609
        %2626 = vmatpush.msra.mxu0 %v2608
        %2627 = vmatpush.msra.mxu0 %v2607
        %2628 = vmatpush.msra.mxu0 %v2606
        %2629 = vmatpush.msra.mxu0 %v2605
        %2630 = vmatpush.msra.mxu0 %v2604
        %2631 = vmatpush.msra.mxu0 %v2603
        %2632 = vmatpush.msra.mxu0 %v2602
        %2633 = vmatpush.msra.mxu0 %v2601
        %2634 = vmatpush.msra.mxu0 %v2600
        %2635 = vmatpush.msra.mxu0 %v2599
        %2636 = vmatpush.msra.mxu0 %v2598
        %2637 = vmatmul.f32.gmra.mxu0 %v2615
        %v2638 = vpop.f32.mrf.mxu0
        %v2639 = vadd.f32 %v2619, %v2638
        %2640 = vdwg.mxu0
        %2641 = vst [vmem:[%s232] sm:$0xff] %v2639
        %v2642 = vadd.f32 %v2584, %v2585
        %2643 = vmatpush.msra.mxu0 %v2613
        %2644 = vmatpush.msra.mxu0 %v2612
        %2645 = vmatpush.msra.mxu0 %v2611
        %2646 = vmatpush.msra.mxu0 %v2610
        %2647 = vmatpush.msra.mxu0 %v2609
        %2648 = vmatpush.msra.mxu0 %v2608
        %2649 = vmatpush.msra.mxu0 %v2607
        %2650 = vmatpush.msra.mxu0 %v2606
        %2651 = vmatpush.msra.mxu0 %v2605
        %2652 = vmatpush.msra.mxu0 %v2604
        %2653 = vmatpush.msra.mxu0 %v2603
        %2654 = vmatpush.msra.mxu0 %v2602
        %2655 = vmatpush.msra.mxu0 %v2601
        %2656 = vmatpush.msra.mxu0 %v2600
        %2657 = vmatpush.msra.mxu0 %v2599
        %2658 = vmatpush.msra.mxu0 %v2598
        %2659 = vmatmul.f32.gmra.mxu0 %v2642
        %v2660 = vpop.f32.mrf.mxu0
        %v2661 = vadd.f32 %v2619, %v2660
        %2662 = vdwg.mxu0
        %2663 = vst [vmem:[%s232 + $0x8] sm:$0xff] %v2661
        %v2664 = vadd.f32 %v2586, %v2587
        %2665 = vmatpush.msra.mxu0 %v2613
        %2666 = vmatpush.msra.mxu0 %v2612
        %2667 = vmatpush.msra.mxu0 %v2611
        %2668 = vmatpush.msra.mxu0 %v2610
        %2669 = vmatpush.msra.mxu0 %v2609
        %2670 = vmatpush.msra.mxu0 %v2608
        %2671 = vmatpush.msra.mxu0 %v2607
        %2672 = vmatpush.msra.mxu0 %v2606
        %2673 = vmatpush.msra.mxu0 %v2605
        %2674 = vmatpush.msra.mxu0 %v2604
        %2675 = vmatpush.msra.mxu0 %v2603
        %2676 = vmatpush.msra.mxu0 %v2602
        %2677 = vmatpush.msra.mxu0 %v2601
        %2678 = vmatpush.msra.mxu0 %v2600
        %2679 = vmatpush.msra.mxu0 %v2599
        %2680 = vmatpush.msra.mxu0 %v2598
        %2681 = vmatmul.f32.gmra.mxu0 %v2664
        %v2682 = vpop.f32.mrf.mxu0
        %v2683 = vadd.f32 %v2619, %v2682
        %2684 = vdwg.mxu0
        %2685 = vst [vmem:[%s232 + $0x10] sm:$0xff] %v2683
        %v2686 = vadd.f32 %v2588, %v2589
        %2687 = vmatpush.msra.mxu0 %v2613
        %2688 = vmatpush.msra.mxu0 %v2612
        %2689 = vmatpush.msra.mxu0 %v2611
        %2690 = vmatpush.msra.mxu0 %v2610
        %2691 = vmatpush.msra.mxu0 %v2609
        %2692 = vmatpush.msra.mxu0 %v2608
        %2693 = vmatpush.msra.mxu0 %v2607
        %2694 = vmatpush.msra.mxu0 %v2606
        %2695 = vmatpush.msra.mxu0 %v2605
        %2696 = vmatpush.msra.mxu0 %v2604
        %2697 = vmatpush.msra.mxu0 %v2603
        %2698 = vmatpush.msra.mxu0 %v2602
        %2699 = vmatpush.msra.mxu0 %v2601
        %2700 = vmatpush.msra.mxu0 %v2600
        %2701 = vmatpush.msra.mxu0 %v2599
        %2702 = vmatpush.msra.mxu0 %v2598
        %2703 = vmatmul.f32.gmra.mxu0 %v2686
        %v2704 = vpop.f32.mrf.mxu0
        %v2705 = vadd.f32 %v2619, %v2704
        %2706 = vdwg.mxu0
        %2707 = vst [vmem:[%s232 + $0x18] sm:$0xff] %v2705
        %v2708 = vadd.f32 %v2590, %v2591
        %2709 = vmatpush.msra.mxu0 %v2613
        %2710 = vmatpush.msra.mxu0 %v2612
        %2711 = vmatpush.msra.mxu0 %v2611
        %2712 = vmatpush.msra.mxu0 %v2610
        %2713 = vmatpush.msra.mxu0 %v2609
        %2714 = vmatpush.msra.mxu0 %v2608
        %2715 = vmatpush.msra.mxu0 %v2607
        %2716 = vmatpush.msra.mxu0 %v2606
        %2717 = vmatpush.msra.mxu0 %v2605
        %2718 = vmatpush.msra.mxu0 %v2604
        %2719 = vmatpush.msra.mxu0 %v2603
        %2720 = vmatpush.msra.mxu0 %v2602
        %2721 = vmatpush.msra.mxu0 %v2601
        %2722 = vmatpush.msra.mxu0 %v2600
        %2723 = vmatpush.msra.mxu0 %v2599
        %2724 = vmatpush.msra.mxu0 %v2598
        %2725 = vmatmul.f32.gmra.mxu0 %v2708
        %v2726 = vpop.f32.mrf.mxu0
        %v2727 = vadd.f32 %v2619, %v2726
        %2728 = vdwg.mxu0
        %2729 = vst [vmem:[%s232 + $0x20] sm:$0xff] %v2727
        %v2730 = vadd.f32 %v2592, %v2593
        %2731 = vmatpush.msra.mxu0 %v2613
        %2732 = vmatpush.msra.mxu0 %v2612
        %2733 = vmatpush.msra.mxu0 %v2611
        %2734 = vmatpush.msra.mxu0 %v2610
        %2735 = vmatpush.msra.mxu0 %v2609
        %2736 = vmatpush.msra.mxu0 %v2608
        %2737 = vmatpush.msra.mxu0 %v2607
        %2738 = vmatpush.msra.mxu0 %v2606
        %2739 = vmatpush.msra.mxu0 %v2605
        %2740 = vmatpush.msra.mxu0 %v2604
        %2741 = vmatpush.msra.mxu0 %v2603
        %2742 = vmatpush.msra.mxu0 %v2602
        %2743 = vmatpush.msra.mxu0 %v2601
        %2744 = vmatpush.msra.mxu0 %v2600
        %2745 = vmatpush.msra.mxu0 %v2599
        %2746 = vmatpush.msra.mxu0 %v2598
        %2747 = vmatmul.f32.gmra.mxu0 %v2730
        %v2748 = vpop.f32.mrf.mxu0
        %v2749 = vadd.f32 %v2619, %v2748
        %2750 = vdwg.mxu0
        %2751 = vst [vmem:[%s232 + $0x28] sm:$0xff] %v2749
        %v2752 = vadd.f32 %v2594, %v2595
        %2753 = vmatpush.msra.mxu0 %v2613
        %2754 = vmatpush.msra.mxu0 %v2612
        %2755 = vmatpush.msra.mxu0 %v2611
        %2756 = vmatpush.msra.mxu0 %v2610
        %2757 = vmatpush.msra.mxu0 %v2609
        %2758 = vmatpush.msra.mxu0 %v2608
        %2759 = vmatpush.msra.mxu0 %v2607
        %2760 = vmatpush.msra.mxu0 %v2606
        %2761 = vmatpush.msra.mxu0 %v2605
        %2762 = vmatpush.msra.mxu0 %v2604
        %2763 = vmatpush.msra.mxu0 %v2603
        %2764 = vmatpush.msra.mxu0 %v2602
        %2765 = vmatpush.msra.mxu0 %v2601
        %2766 = vmatpush.msra.mxu0 %v2600
        %2767 = vmatpush.msra.mxu0 %v2599
        %2768 = vmatpush.msra.mxu0 %v2598
        %2769 = vmatmul.f32.gmra.mxu0 %v2752
        %v2770 = vpop.f32.mrf.mxu0
        %v2771 = vadd.f32 %v2619, %v2770
        %2772 = vdwg.mxu0
        %2773 = vst [vmem:[%s232 + $0x30] sm:$0xff] %v2771
        %v2774 = vadd.f32 %v2596, %v2597
        %2775 = vmatpush.msra.mxu0 %v2613
        %2776 = vmatpush.msra.mxu0 %v2612
        %2777 = vmatpush.msra.mxu0 %v2611
        %2778 = vmatpush.msra.mxu0 %v2610
        %2779 = vmatpush.msra.mxu0 %v2609
        %2780 = vmatpush.msra.mxu0 %v2608
        %2781 = vmatpush.msra.mxu0 %v2607
        %2782 = vmatpush.msra.mxu0 %v2606
        %2783 = vmatpush.msra.mxu0 %v2605
        %2784 = vmatpush.msra.mxu0 %v2604
        %2785 = vmatpush.msra.mxu0 %v2603
        %2786 = vmatpush.msra.mxu0 %v2602
        %2787 = vmatpush.msra.mxu0 %v2601
        %2788 = vmatpush.msra.mxu0 %v2600
        %2789 = vmatpush.msra.mxu0 %v2599
        %2790 = vmatpush.msra.mxu0 %v2598
        %2791 = vmatmul.f32.gmra.mxu0 %v2774
        %v2792 = vpop.f32.mrf.mxu0
        %v2793 = vadd.f32 %v2619, %v2792
        %2794 = vdwg.mxu0
        %2795 = vst [vmem:[%s232 + $0x38] sm:$0xff] %v2793
        %s2796 = sand.u32 %s119, 1
        %s2797 = scalar_lea.sflag [#allocation4], %s2796
        %s2798 = sand.u32 %s119, 1
        %s2799 = smul.addr %s2798, 64
        %s2800 = scalar_lea.vmem [#allocation7], %s2799
        // Predicated region
        $region45: #{tpu_custom_call.1} parent=35 // pred_check
          %p2801 = pneg %p129
        $region46: #{tpu_custom_call.1} parent=35 // pred_check_branch
          %2803 = sbr.rel (%p2801) target = $region48
        $region47: #{tpu_custom_call.1} parent=35 // pred_region
          %2805 = vsyncadd %s2797, 0
          %s2806 = smul.addr %s22, 8
          %s2807 = smul.addr %s2806, 8
          %s2808 = scalar_lea.hbm %s4, %s2807
          %s2810 = sshll.u32 %s2800, 4
          %s2811 = int_to_ptr.vmem [resolvable:$true] %s2810
          %s2812 = sshll.u32 %s2808, 4
          %s2813 = int_to_ptr.hbm [resolvable:$true] %s2812
          %2815 = dma.vmem_to_hbm [thread:$0]  %s2811, 1024, %s2813, %s2797
        $region48: #{tpu_custom_call.1} parent=35 // pred_fallthru
          _
      $region36: #{tpu_custom_call.1} parent=5 // pred_fallthru
        _
      %p2816 = scmp.le.s32.totalorder 2, %s17
      // Predicated region
      $region49: #{tpu_custom_call.1} parent=5 // pred_check
        %p2817 = pneg %p2816
      $region50: #{tpu_custom_call.1} parent=5 // pred_check_branch
        %2819 = sbr.rel (%p2817) target = $region52
      $region51: #{tpu_custom_call.1} parent=5 // pred_region
        %s2820 = ssub.s32 %s17, 2
        // Predicated region
        $region53: #{tpu_custom_call.1} parent=51 // pred_check
          %p2821 = pneg %p135
        $region54: #{tpu_custom_call.1} parent=51 // pred_check_branch
          %2823 = sbr.rel (%p2821) target = $region56
        $region55: #{tpu_custom_call.1} parent=51 // pred_region
          %s2824 = sand.u32 %s120, 1
          %s2825 = scalar_lea.sflag [#allocation4], %s2824
          %s2826 = sand.u32 %s120, 1
          %s2827 = smul.addr %s2826, 64
          %s2828 = scalar_lea.vmem [#allocation7], %s2827
          %2830 = dma.done %s2825, 1024
        $region56: #{tpu_custom_call.1} parent=51 // pred_fallthru
          _
      $region52: #{tpu_custom_call.1} parent=5 // pred_fallthru
        _
    $region6: #{tpu_custom_call.1} parent=1 // loop_footer
      %s21 = sadd.s32 1, %s17
    $region7: #{tpu_custom_call.1} parent=1 // loop_footer_branch
      %16 = sbr.rel target = $region3
    $region8: #{tpu_custom_call.1} parent=1 // loop_exit
      _
    %2831 = vsyncpa [#allocation3], 1
    %s2832 = scalar_lea.sflag [#allocation3], 1
    %2833 = vsyncpa %s2832, 1
    %2834 = vsyncpa [#allocation6], 1
    %2835 = vsyncpa [#allocation4], 1
    %s2836 = scalar_lea.sflag [#allocation4], 1
    %2837 = vsyncpa %s2836, 1

</llo_original>
